<compile_context>
chip_gen: v5e
topology: v5e:2x2
jax: 0.10.0
libtpu: 0.0.40
codegen_flags: <defaults>
</compile_context>

<pallas_src>
import functools

import jax
import jax.numpy as jnp
import numpy as np
from jax.experimental import pallas as pl
from jax.experimental.pallas import tpu as pltpu


def _hpwl_kernel(blk_start_ref, blk_cnt_ref,        # scalar-prefetch (SMEM)
                 pins_ref, nets_ref,                 # inputs (VMEM tiles)
                 out_ref,                            # output tile (1, tn)
                 acc_ref,                            # scratch (4, tn)
                 *, tn, x_weight, y_weight):
    i = pl.program_id(0)           # net-tile index ("parallel")
    j = pl.program_id(1)           # pin-block step within this net tile ("arbitrary")
    nj = pl.num_programs(1)
    ninf = jnp.float32(-jnp.inf)

    # Reset the running [max x, max -x, max y, max -y] accumulator for this net tile.
    @pl.when(j == 0)
    def _():
        acc_ref[...] = jnp.full_like(acc_ref, ninf)

    # Only the real pin blocks of this net tile contribute; padded steps are skipped.
    @pl.when(j < blk_cnt_ref[i])
    def _():
        x = pins_ref[:, 0:1]                                    # (tp, 1)
        y = pins_ref[:, 1:2]                                    # (tp, 1)
        p2n = pltpu.bitcast(pins_ref[:, 2:3], jnp.int32)        # (tp, 1) exact net ids
        net_ids = i * tn + jax.lax.broadcasted_iota(jnp.int32, (1, tn), 1)
        mask = p2n == net_ids                                   # (tp, tn) membership

        def seg_max(v):   # masked segmented max over the pin (sublane) axis
            return jnp.max(jnp.where(mask, v, ninf), axis=0, keepdims=True)

        cand = jnp.concatenate(
            [seg_max(x), seg_max(-x), seg_max(y), seg_max(-y)], axis=0)   # (4, tn)
        acc_ref[...] = jnp.maximum(acc_ref[...], cand)

    # Finalize: per-net spans -> weighted per-net HPWL contribution for this tile.
    @pl.when(j == nj - 1)
    def _():
        acc = acc_ref[...]
        maxx, negminx = acc[0:1, :], acc[1:2, :]
        maxy, negminy = acc[2:3, :], acc[3:4, :]
        has_pin = maxx > ninf
        span_x = jnp.where(has_pin, maxx + negminx, 0.0)
        span_y = jnp.where(has_pin, maxy + negminy, 0.0)
        nw, nwx, nm = nets_ref[0:1, :], nets_ref[1:2, :], nets_ref[2:3, :]
        out_ref[...] = (nwx * nm * span_x) * x_weight + (nw * nm * span_y) * y_weight


def _hpwl_pallas(blk_start, blk_cnt, pins, nets, *, tp, tn, n_tiles, max_blk,
                 num_pin_blocks, n_pad, x_weight, y_weight):
    kernel = functools.partial(_hpwl_kernel, tn=tn,
                               x_weight=float(x_weight), y_weight=float(y_weight))

    def pin_map(i, j, bs, bc):
        # data-dependent pin block; clamp so padded (skipped) steps never DMA out of range
        return (jnp.minimum(bs[i] + j, num_pin_blocks - 1), 0)

    def net_map(i, j, bs, bc):
        return (0, i)

    return pl.pallas_call(
        kernel,
        out_shape=jax.ShapeDtypeStruct((1, n_pad), jnp.float32),
        grid_spec=pltpu.PrefetchScalarGridSpec(
            num_scalar_prefetch=2,
            grid=(n_tiles, max_blk),
            in_specs=[
                pl.BlockSpec((tp, 4), pin_map),   # fused [x, y, p2n_bits, 0] pin blocks
                pl.BlockSpec((8, tn), net_map),   # fused [nw, nwx, nm, 0..]; resident over j
            ],
            out_specs=pl.BlockSpec((1, tn), net_map),
            scratch_shapes=[pltpu.VMEM((4, tn), jnp.float32)],
        ),
        compiler_params=pltpu.CompilerParams(
            dimension_semantics=("parallel", "arbitrary")),
    )(blk_start, blk_cnt, pins, nets)


class HPWL:
    """JAX/Pallas equivalent of dreamplacefpga HPWL (algorithm='atomic', CPU semantics)."""

    def __init__(self, x_wirelen_wt, y_wirelen_wt, pin2net_map, net_weights,
                 num_carry_chains, cc_net_weight, dir_net_weight, net_mask,
                 tp=256, tn=256):
        assert tp % 8 == 0 and tn % 128 == 0
        self.xWeight = float(x_wirelen_wt)
        self.yWeight = float(y_wirelen_wt)
        self.tp = int(tp)
        self.tn = int(tn)

        nw = np.asarray(net_weights, dtype=np.float32).ravel()
        nwx = nw.copy()
        if num_carry_chains > 0 and cc_net_weight > 1.0 and dir_net_weight:
            nwx[nwx == np.float32(cc_net_weight)] = np.float32(1.5 * cc_net_weight)
        nm = np.asarray(net_mask, dtype=np.float32).ravel()
        num_nets = int(nw.shape[0])

        self.net_weights = jnp.asarray(nw)
        self.net_weights_x = jnp.asarray(nwx)
        self.net_mask = jnp.asarray(nm)

        p2n = np.asarray(pin2net_map).astype(np.int64).ravel()
        self.num_pins = int(p2n.shape[0])

        self.p_pad = max(-(-self.num_pins // self.tp) * self.tp, self.tp)
        self.n_pad = max(-(-num_nets // self.tn) * self.tn, self.tn)
        self.n_tiles = self.n_pad // self.tn
        self.num_pin_blocks = self.p_pad // self.tp

        # CSR schedule: sort pins by net id so each net tile owns a contiguous pin range.
        order = np.argsort(p2n, kind="stable")
        sorted_p2n = p2n[order]
        tile_ids = np.arange(self.n_tiles, dtype=np.int64)
        lo = np.searchsorted(sorted_p2n, tile_ids * self.tn, side="left")
        hi = np.searchsorted(sorted_p2n, (tile_ids + 1) * self.tn, side="left")
        blk_start = np.minimum(lo // self.tp, self.num_pin_blocks - 1).astype(np.int32)
        blk_end = np.where(hi > lo, (hi - 1) // self.tp + 1, lo // self.tp)
        blk_cnt = np.maximum(blk_end - (lo // self.tp), 0).astype(np.int32)
        self.max_blk = max(int(blk_cnt.max()) if blk_cnt.size else 1, 1)
        self.blk_start = jnp.asarray(blk_start)
        self.blk_cnt = jnp.asarray(blk_cnt)
        self.order = jnp.asarray(order.astype(np.int32))

        # pin2net column stored as raw int32 bit patterns inside the float pin slab.
        p2n_pad = np.full(self.p_pad, self.n_pad, dtype=np.int32)  # pad id never matches a net
        p2n_pad[: self.num_pins] = sorted_p2n.astype(np.int32)
        self.p2n_bits = jnp.asarray(p2n_pad.view(np.float32))

        nets = np.zeros((8, self.n_pad), dtype=np.float32)
        nets[0, :num_nets] = nw
        nets[1, :num_nets] = nwx
        nets[2, :num_nets] = nm
        self.nets_packed = jnp.asarray(nets)

        # TODO(synk): the explicit 'net-by-net' front-end (flat_netpin / netpin_start args)
        # is not exposed; the atomic path below already uses an equivalent sorted-pin CSR
        # schedule internally.

    def forward(self, pos):
        pos = jnp.asarray(pos, jnp.float32)
        xs = jnp.take(pos[: self.num_pins], self.order)
        ys = jnp.take(pos[self.num_pins: 2 * self.num_pins], self.order)
        pins = jnp.zeros((self.p_pad, 4), jnp.float32)
        pins = pins.at[: self.num_pins, 0].set(xs)
        pins = pins.at[: self.num_pins, 1].set(ys)
        pins = pins.at[:, 2].set(self.p2n_bits)

        per_net = _hpwl_pallas(
            self.blk_start, self.blk_cnt, pins, self.nets_packed,
            tp=self.tp, tn=self.tn, n_tiles=self.n_tiles, max_blk=self.max_blk,
            num_pin_blocks=self.num_pin_blocks, n_pad=self.n_pad,
            x_weight=self.xWeight, y_weight=self.yWeight)
        return jnp.sum(per_net)


def _hpwl_reference(pos, pin2net, nw, nwx, nm, x_w, y_w):
    pos = np.asarray(pos); pin2net = np.asarray(pin2net)
    nw = np.asarray(nw, np.float64); nwx = np.asarray(nwx, np.float64)
    nm = np.asarray(nm, np.float64)
    num_pins = pin2net.shape[0]
    num_nets = nw.shape[0]
    x = pos[:num_pins]
    y = pos[num_pins:]
    sx = np.zeros(num_nets, np.float64)
    sy = np.zeros(num_nets, np.float64)
    for n in range(num_nets):
        sel = pin2net == n
        if sel.any():
            sx[n] = x[sel].max() - x[sel].min()
            sy[n] = y[sel].max() - y[sel].min()
    return (nwx * nm * sx).sum() * x_w + (nw * nm * sy).sum() * y_w


if __name__ == "__main__":
    key = jax.random.PRNGKey(0)
    num_pins = 2048
    num_nets = 500
    cc_net_weight = 2.0

    k1, k2 = jax.random.split(key, 2)
    pos = jax.random.uniform(k1, (2 * num_pins,), jnp.float32, 0.0, 100.0)
    pin2net_map = jax.random.randint(k2, (num_pins,), 0, num_nets, jnp.int32)
    # Mostly unit weights, a few carry-chain nets with cc_net_weight.
    net_weights = jnp.where(jnp.arange(num_nets) % 5 == 0,
                            jnp.float32(cc_net_weight), jnp.float32(1.0))
    # Mask off some nets.
    net_mask = jnp.where(jnp.arange(num_nets) % 7 == 3,
                         jnp.float32(0.0), jnp.float32(1.0))

    module = HPWL(x_wirelen_wt=1.0, y_wirelen_wt=1.2,
                  pin2net_map=pin2net_map, net_weights=net_weights,
                  num_carry_chains=2, cc_net_weight=cc_net_weight,
                  dir_net_weight=True, net_mask=net_mask,
                  tp=256, tn=256)

    result = jax.block_until_ready(module.forward(pos))

    ref = _hpwl_reference(pos, pin2net_map, net_weights, module.net_weights_x,
                          net_mask, module.xWeight, module.yWeight)
    np.testing.assert_allclose(float(result), float(ref), rtol=1e-5, atol=1e-3)
    print("KERNEL_OK")
</pallas_src>

<mosaic_0001>
module attributes {stable_mosaic.version = 11 : i64} {
  func.func @_hpwl_kernel(%arg0: i32, %arg1: i32, %arg2: memref<2xi32, #tpu.memory_space<smem>>, %arg3: memref<2xi32, #tpu.memory_space<smem>>, %arg4: memref<256x4xf32, #tpu.memory_space<vmem>>, %arg5: memref<8x256xf32, #tpu.memory_space<vmem>>, %arg6: memref<1x256xf32, #tpu.memory_space<vmem>>, %arg7: memref<4x256xf32, #tpu.memory_space<vmem>>) attributes {dimension_semantics = [#tpu.dimension_semantics<parallel>, #tpu.dimension_semantics<arbitrary>], iteration_bounds = array<i64: 2, 5>, scalar_prefetch = 2 : i64, scratch_operands = 1 : i64, tpu.core_type = #tpu.core_type<tc>, window_params = [{transform_indices = @transform_0, window_bounds = array<i64: 256, 4>}, {transform_indices = @transform_1, window_bounds = array<i64: 8, 256>}, {transform_indices = @transform_2, window_bounds = array<i64: 1, 256>}]} {
    %c0_i32 = arith.constant 0 : i32
    %0 = arith.cmpi eq, %arg1, %c0_i32 : i32
    %1 = arith.extui %0 : i1 to i32
    %cst = arith.constant 0xFF800000 : f32
    %c0_i32_0 = arith.constant 0 : i32
    %2 = arith.cmpi ne, %1, %c0_i32_0 : i32
    scf.if %2 {
      %11 = vector.broadcast %cst : f32 to vector<4x256xf32>
      %c0 = arith.constant 0 : index
      %c0_5 = arith.constant 0 : index
      %12 = vector.load %arg7[%c0, %c0_5] : memref<4x256xf32, #tpu.memory_space<vmem>>, vector<4x256xf32>
      tpu.vector_store %arg7[%c0, %c0_5], %11 {strides = array<i32>} : memref<4x256xf32, #tpu.memory_space<vmem>>, vector<4x256xf32>,
    } else {
    }
    %3 = arith.index_cast %arg0 : i32 to index
    %4 = memref.load %arg3[%3] : memref<2xi32, #tpu.memory_space<smem>>
    %5 = arith.cmpi slt, %arg1, %4 : i32
    %6 = arith.extui %5 : i1 to i32
    %cst_1 = arith.constant 0xFF800000 : f32
    %c0_i32_2 = arith.constant 0 : i32
    %7 = arith.cmpi ne, %6, %c0_i32_2 : i32
    scf.if %7 {
      %c0 = arith.constant 0 : index
      %c0_5 = arith.constant 0 : index
      %11 = vector.load %arg4[%c0, %c0_5] : memref<256x4xf32, #tpu.memory_space<vmem>>, vector<256x1xf32>
      %c0_6 = arith.constant 0 : index
      %c1 = arith.constant 1 : index
      %12 = vector.load %arg4[%c0_6, %c1] : memref<256x4xf32, #tpu.memory_space<vmem>>, vector<256x1xf32>
      %c0_7 = arith.constant 0 : index
      %c2 = arith.constant 2 : index
      %13 = vector.load %arg4[%c0_7, %c2] : memref<256x4xf32, #tpu.memory_space<vmem>>, vector<256x1xf32>
      %14 = tpu.bitcast %13 : vector<256x1xf32> -> vector<256x1xi32>
      %c256_i32 = arith.constant 256 : i32
      %15 = arith.muli %arg0, %c256_i32 : i32
      %16 = tpu.iota {dimensions = array<i32: 1>} : vector<1x256xi32>
      %17 = vector.broadcast %15 : i32 to vector<1x256xi32>
      %18 = arith.addi %17, %16 : vector<1x256xi32>
      %19 = vector.broadcast %14 : vector<256x1xi32> to vector<256x256xi32>
      %20 = vector.broadcast %18 : vector<1x256xi32> to vector<256x256xi32>
      %21 = arith.cmpi eq, %19, %20 : vector<256x256xi32>
      %22 = vector.shape_cast %11 : vector<256x1xf32> to vector<256x1xf32>
      %23 = vector.broadcast %22 : vector<256x1xf32> to vector<256x256xf32>
      %24 = vector.broadcast %cst_1 : f32 to vector<256x256xf32>
      %25 = arith.select %21, %23, %24 : vector<256x256xi1>, vector<256x256xf32>
      %cst_8 = arith.constant dense<0xFF800000> : vector<256xf32>
      %26 = vector.multi_reduction <maximumf>, %25, %cst_8 [0] : vector<256x256xf32> to vector<256xf32>
      %27 = vector.shape_cast %26 : vector<256xf32> to vector<1x256xf32>
      %cst_9 = arith.constant 0.000000e+00 : f32
      %28 = vector.broadcast %cst_9 : f32 to vector<256x1xf32>
      %29 = arith.subf %28, %11 : vector<256x1xf32>
      %30 = vector.shape_cast %29 : vector<256x1xf32> to vector<256x1xf32>
      %31 = vector.broadcast %30 : vector<256x1xf32> to vector<256x256xf32>
      %32 = vector.broadcast %cst_1 : f32 to vector<256x256xf32>
      %33 = arith.select %21, %31, %32 : vector<256x256xi1>, vector<256x256xf32>
      %cst_10 = arith.constant dense<0xFF800000> : vector<256xf32>
      %34 = vector.multi_reduction <maximumf>, %33, %cst_10 [0] : vector<256x256xf32> to vector<256xf32>
      %35 = vector.shape_cast %34 : vector<256xf32> to vector<1x256xf32>
      %36 = vector.shape_cast %12 : vector<256x1xf32> to vector<256x1xf32>
      %37 = vector.broadcast %36 : vector<256x1xf32> to vector<256x256xf32>
      %38 = vector.broadcast %cst_1 : f32 to vector<256x256xf32>
      %39 = arith.select %21, %37, %38 : vector<256x256xi1>, vector<256x256xf32>
      %cst_11 = arith.constant dense<0xFF800000> : vector<256xf32>
      %40 = vector.multi_reduction <maximumf>, %39, %cst_11 [0] : vector<256x256xf32> to vector<256xf32>
      %41 = vector.shape_cast %40 : vector<256xf32> to vector<1x256xf32>
      %cst_12 = arith.constant 0.000000e+00 : f32
      %42 = vector.broadcast %cst_12 : f32 to vector<256x1xf32>
      %43 = arith.subf %42, %12 : vector<256x1xf32>
      %44 = vector.shape_cast %43 : vector<256x1xf32> to vector<256x1xf32>
      %45 = vector.broadcast %44 : vector<256x1xf32> to vector<256x256xf32>
      %46 = vector.broadcast %cst_1 : f32 to vector<256x256xf32>
      %47 = arith.select %21, %45, %46 : vector<256x256xi1>, vector<256x256xf32>
      %cst_13 = arith.constant dense<0xFF800000> : vector<256xf32>
      %48 = vector.multi_reduction <maximumf>, %47, %cst_13 [0] : vector<256x256xf32> to vector<256xf32>
      %49 = vector.shape_cast %48 : vector<256xf32> to vector<1x256xf32>
      %50 = tpu.concatenate %27, %35, %41, %49 in 0 : vector<1x256xf32>, vector<1x256xf32>, vector<1x256xf32>, vector<1x256xf32> -> vector<4x256xf32>
      %c0_14 = arith.constant 0 : index
      %c0_15 = arith.constant 0 : index
      %51 = vector.load %arg7[%c0_14, %c0_15] : memref<4x256xf32, #tpu.memory_space<vmem>>, vector<4x256xf32>
      %52 = arith.maximumf %51, %50 : vector<4x256xf32>
      %c0_16 = arith.constant 0 : index
      %c0_17 = arith.constant 0 : index
      %53 = vector.load %arg7[%c0_16, %c0_17] : memref<4x256xf32, #tpu.memory_space<vmem>>, vector<4x256xf32>
      tpu.vector_store %arg7[%c0_16, %c0_17], %52 {strides = array<i32>} : memref<4x256xf32, #tpu.memory_space<vmem>>, vector<4x256xf32>,
    } else {
    }
    %c4_i32 = arith.constant 4 : i32
    %8 = arith.cmpi eq, %arg1, %c4_i32 : i32
    %9 = arith.extui %8 : i1 to i32
    %cst_3 = arith.constant 0xFF800000 : f32
    %c0_i32_4 = arith.constant 0 : i32
    %10 = arith.cmpi ne, %9, %c0_i32_4 : i32
    scf.if %10 {
      %c0 = arith.constant 0 : index
      %c0_5 = arith.constant 0 : index
      %11 = vector.load %arg7[%c0, %c0_5] : memref<4x256xf32, #tpu.memory_space<vmem>>, vector<4x256xf32>
      %12 = vector.extract_strided_slice %11 {offsets = [0, 0], sizes = [1, 256], strides = [1, 1]} : vector<4x256xf32> to vector<1x256xf32>
      %13 = vector.extract_strided_slice %11 {offsets = [1, 0], sizes = [1, 256], strides = [1, 1]} : vector<4x256xf32> to vector<1x256xf32>
      %14 = vector.extract_strided_slice %11 {offsets = [2, 0], sizes = [1, 256], strides = [1, 1]} : vector<4x256xf32> to vector<1x256xf32>
      %15 = vector.extract_strided_slice %11 {offsets = [3, 0], sizes = [1, 256], strides = [1, 1]} : vector<4x256xf32> to vector<1x256xf32>
      %16 = vector.broadcast %cst_3 : f32 to vector<1x256xf32>
      %17 = arith.cmpf ogt, %12, %16 : vector<1x256xf32>
      %18 = arith.addf %12, %13 : vector<1x256xf32>
      %cst_6 = arith.constant 0.000000e+00 : f32
      %19 = vector.broadcast %cst_6 : f32 to vector<1x256xf32>
      %20 = arith.select %17, %18, %19 : vector<1x256xi1>, vector<1x256xf32>
      %21 = arith.addf %14, %15 : vector<1x256xf32>
      %cst_7 = arith.constant 0.000000e+00 : f32
      %22 = vector.broadcast %cst_7 : f32 to vector<1x256xf32>
      %23 = arith.select %17, %21, %22 : vector<1x256xi1>, vector<1x256xf32>
      %c0_8 = arith.constant 0 : index
      %c0_9 = arith.constant 0 : index
      %24 = vector.load %arg5[%c0_8, %c0_9] : memref<8x256xf32, #tpu.memory_space<vmem>>, vector<1x256xf32>
      %c1 = arith.constant 1 : index
      %c0_10 = arith.constant 0 : index
      %25 = vector.load %arg5[%c1, %c0_10] : memref<8x256xf32, #tpu.memory_space<vmem>>, vector<1x256xf32>
      %c2 = arith.constant 2 : index
      %c0_11 = arith.constant 0 : index
      %26 = vector.load %arg5[%c2, %c0_11] : memref<8x256xf32, #tpu.memory_space<vmem>>, vector<1x256xf32>
      %27 = arith.mulf %25, %26 : vector<1x256xf32>
      %28 = arith.mulf %27, %20 : vector<1x256xf32>
      %cst_12 = arith.constant 1.000000e+00 : f32
      %29 = vector.broadcast %cst_12 : f32 to vector<1x256xf32>
      %30 = arith.mulf %28, %29 : vector<1x256xf32>
      %31 = arith.mulf %24, %26 : vector<1x256xf32>
      %32 = arith.mulf %31, %23 : vector<1x256xf32>
      %cst_13 = arith.constant 1.200000e+00 : f32
      %33 = vector.broadcast %cst_13 : f32 to vector<1x256xf32>
      %34 = arith.mulf %32, %33 : vector<1x256xf32>
      %35 = arith.addf %30, %34 : vector<1x256xf32>
      %c0_14 = arith.constant 0 : index
      %c0_15 = arith.constant 0 : index
      %36 = vector.load %arg6[%c0_14, %c0_15] : memref<1x256xf32, #tpu.memory_space<vmem>>, vector<1x256xf32>
      tpu.vector_store %arg6[%c0_14, %c0_15], %35 {strides = array<i32>} : memref<1x256xf32, #tpu.memory_space<vmem>>, vector<1x256xf32>,
    } else {
    }
    return
  }
  func.func @transform_0(%arg0: i32, %arg1: i32, %arg2: memref<2xi32, #tpu.memory_space<smem>>, %arg3: memref<2xi32, #tpu.memory_space<smem>>) -> (i32, i32) {
    %0 = arith.index_cast %arg0 : i32 to index
    %1 = memref.load %arg2[%0] : memref<2xi32, #tpu.memory_space<smem>>
    %2 = arith.addi %1, %arg1 : i32
    %c7_i32 = arith.constant 7 : i32
    %3 = arith.minsi %2, %c7_i32 : i32
    %c0_i32 = arith.constant 0 : i32
    %c0_i32_0 = arith.constant 0 : i32
    return %3, %c0_i32 : i32, i32
  }
  func.func @transform_1(%arg0: i32, %arg1: i32, %arg2: memref<2xi32, #tpu.memory_space<smem>>, %arg3: memref<2xi32, #tpu.memory_space<smem>>) -> (i32, i32) {
    %c0_i32 = arith.constant 0 : i32
    %c0_i32_0 = arith.constant 0 : i32
    return %c0_i32, %arg0 : i32, i32
  }
  func.func @transform_2(%arg0: i32, %arg1: i32, %arg2: memref<2xi32, #tpu.memory_space<smem>>, %arg3: memref<2xi32, #tpu.memory_space<smem>>) -> (i32, i32) {
    %c0_i32 = arith.constant 0 : i32
    %c0_i32_0 = arith.constant 0 : i32
    return %c0_i32, %arg0 : i32, i32
  }
}

</mosaic_0001>

<llo_original>
// kernel: tpu_custom_call.1
$region0: #{tpu_custom_call.1}
  #allocation0 [shape = 'u32[]', space=smem, size = 0x4, offset = 0x4, fixed_abs, tag = 'smem constant byte address 0x4 - core index']
  #allocation1 [shape = 'u32[72,128]{1,0:T(1,128)}', space=vmem, size = 0x9000, scoped, tag = 'internal scratch']
  #allocation2 [shape = 'f32[4,256]{1,0:T(4,128)}', space=vmem, size = 0x1000, scoped, tag = 'scratch operand']
  #allocation3 [shape = 's32[1]{0}', space=sflag, size = 0x4, scoped, tag = 'scoped memory for tpu_custom_call.1']
  #allocation4 [shape = 'u8[512]{0}', space=smem, size = 0x200, scoped, tag = 'prefetched SMEM operand 0']
  #allocation5 [shape = 'u8[512]{0}', space=smem, size = 0x200, scoped, tag = 'prefetched SMEM operand 1']
  %s0 = inlined_call_operand.vmem [shape: s32[2], index: 0, kind: input, shape index: {}]
  %s1 = inlined_call_operand.vmem [shape: s32[2], index: 1, kind: input, shape index: {}]
  %s2 = inlined_call_operand.vmem [shape: f32[2048,4], index: 2, kind: input, shape index: {}]
  %s3 = inlined_call_operand.vmem [shape: f32[8,512], index: 3, kind: input, shape index: {}]
  %s4 = inlined_call_operand.hbm [shape: f32[1,512], index: 4, kind: output, shape index: {}]
  %s5 = sld [smem:[#allocation0]]
  $region53: #{tpu_custom_call.1} parent=0
    _
  %s7 = ssub.s32 1, %s5
  %s8 = scalar_select 0, %s7, %s5
  %s10 = sshll.u32 %s0, 4
  %s11 = int_to_ptr.vmem [resolvable:$true] %s10
  %13 = dma.vmem_to_smem %s11, 16, [#allocation4], [#allocation3]
  %s15 = sshll.u32 %s1, 4
  %s16 = int_to_ptr.vmem [resolvable:$true] %s15
  %18 = dma.vmem_to_smem %s16, 16, [#allocation5], [#allocation3]
  %20 = dma.done [#allocation3], 32
  %21 = sfence
  $region1: #{tpu_custom_call.1} parent=0
    #allocation6 [shape = 'u8[2048]{0}', space=vmem, size = 0x800, scoped, tag = 'output window, operand 0']
    #allocation7 [shape = 's32[2]{0}', space=sflag, size = 0x8, scoped, tag = 'scoped memory for tpu_custom_call.1']
    %22 = vsyncpa [#allocation7], 0
    %s23 = scalar_lea.sflag [#allocation7], 1
    %24 = vsyncpa %s23, 0
    loop: start=0, step=1, limit=12
    $region2: #{tpu_custom_call.1} parent=1 // loop_pre_header
      _
    $region3: #{tpu_custom_call.1} parent=1 // loop_header
      %s26 = sphi 0, %s30
      %p27 = scmp.ge.s32.totalorder %s26, 12
      %s33 = sphi 0, %s45
      %s34 = sphi 0, %s41
      %s35 = sphi 0, %s33
      %s36 = sphi 0, %s34
      %s37 = sphi 0, %s35
      %s38 = sphi 0, %s36
      %s56 = sphi 0, %s58
      %s59 = sphi 0, %s56
      %s60 = sphi 0, %s59
      %s76 = sphi 0, %s60
      %s82 = sphi 0, %s84
      %s85 = sphi 0, %s82
      %s86 = sphi 0, %s85
      %s102 = sphi 0, %s86
      %s108 = sphi 0, %s110
      %s111 = sphi 0, %s108
      %s112 = sphi 0, %s111
      %s128 = sphi 0, %s112
    $region4: #{tpu_custom_call.1} parent=1 // loop_header_branch
      %29 = sbr.rel (%p27) target = $region8
    $region5: #{tpu_custom_call.1} parent=1 // loop_body
      %s31 = ssub.s32 %s26, 1
      %s32 = ssub.s32 %s26, 2
      %s39 = sadd.s32 1, %s34
      %p40 = scmp.ge.s32.totalorder %s39, 5
      %s41 = scalar_select %p40, 0, %s39
      %s42 = sadd.s32 1, %s33
      %s43 = scalar_select %p40, %s42, %s33
      %p44 = scmp.ge.s32.totalorder %s43, 2
      %s45 = scalar_select %p44, 0, %s43
      %s46 = sld [smem:[#allocation4 + %s33]]
      %s47 = sadd.s32 %s46, %s34
      %p48 = scmp.lt.s32.totalorder %s47, 7
      %s49 = scalar_select %p48, %s47, 7
      %s50 = sld [smem:[#allocation4 + %s45]]
      %s51 = sadd.s32 %s50, %s41
      %p52 = scmp.lt.s32.totalorder %s51, 7
      %s53 = scalar_select %p52, %s51, 7
      %s54 = ssub.s32 %s49, %s53
      %p55 = scmp.eq.s32.totalorder %s54, 0
      %s57 = sadd.s32 %s56, 1
      %s58 = scalar_select %p55, %s56, %s57
      %p61 = pneg %p55
      %p62 = scmp.eq.s32.totalorder %s26, 9
      %p63 = por %p61, %p62
      %p64 = scmp.ne.s32.totalorder %s56, %s59
      %p65 = scmp.eq.s32.totalorder %s26, 0
      %p66 = por %p64, %p65
      %p67 = scmp.ne.s32.totalorder %s56, %s59
      %p68 = scmp.eq.s32.totalorder %s31, 9
      %p69 = por %p67, %p68
      %p70 = scmp.ne.s32.totalorder %s59, %s60
      %p71 = scmp.eq.s32.totalorder %s31, 0
      %p72 = por %p70, %p71
      %p73 = scmp.ne.s32.totalorder %s59, %s60
      %p74 = scmp.eq.s32.totalorder %s32, 9
      %p75 = por %p73, %p74
      %p77 = scmp.ne.s32.totalorder %s60, %s76
      %p78 = scmp.eq.s32.totalorder %s32, 0
      %p79 = por %p77, %p78
      %s80 = ssub.s32 %s33, %s45
      %p81 = scmp.eq.s32.totalorder %s80, 0
      %s83 = sadd.s32 %s82, 1
      %s84 = scalar_select %p81, %s82, %s83
      %p87 = pneg %p81
      %p88 = scmp.eq.s32.totalorder %s26, 9
      %p89 = por %p87, %p88
      %p90 = scmp.ne.s32.totalorder %s82, %s85
      %p91 = scmp.eq.s32.totalorder %s26, 0
      %p92 = por %p90, %p91
      %p93 = scmp.ne.s32.totalorder %s82, %s85
      %p94 = scmp.eq.s32.totalorder %s31, 9
      %p95 = por %p93, %p94
      %p96 = scmp.ne.s32.totalorder %s85, %s86
      %p97 = scmp.eq.s32.totalorder %s31, 0
      %p98 = por %p96, %p97
      %p99 = scmp.ne.s32.totalorder %s85, %s86
      %p100 = scmp.eq.s32.totalorder %s32, 9
      %p101 = por %p99, %p100
      %p103 = scmp.ne.s32.totalorder %s86, %s102
      %p104 = scmp.eq.s32.totalorder %s32, 0
      %p105 = por %p103, %p104
      %s106 = ssub.s32 %s33, %s45
      %p107 = scmp.eq.s32.totalorder %s106, 0
      %s109 = sadd.s32 %s108, 1
      %s110 = scalar_select %p107, %s108, %s109
      %p113 = pneg %p107
      %p114 = scmp.eq.s32.totalorder %s26, 9
      %p115 = por %p113, %p114
      %p116 = scmp.ne.s32.totalorder %s108, %s111
      %p117 = scmp.eq.s32.totalorder %s26, 0
      %p118 = por %p116, %p117
      %p119 = scmp.ne.s32.totalorder %s108, %s111
      %p120 = scmp.eq.s32.totalorder %s31, 9
      %p121 = por %p119, %p120
      %p122 = scmp.ne.s32.totalorder %s111, %s112
      %p123 = scmp.eq.s32.totalorder %s31, 0
      %p124 = por %p122, %p123
      %p125 = scmp.ne.s32.totalorder %s111, %s112
      %p126 = scmp.eq.s32.totalorder %s32, 9
      %p127 = por %p125, %p126
      %p129 = scmp.ne.s32.totalorder %s112, %s128
      %p130 = scmp.eq.s32.totalorder %s32, 0
      %p131 = por %p129, %p130
      %p132 = scmp.le.s32.totalorder 1, %s26
      %p133 = scmp.lt.s32.totalorder %s26, 11
      %p134 = pnand %p132, %p133
      %p135 = pneg %p134
      // Predicated region
      $region9: #{tpu_custom_call.1} parent=5 // pred_check
        _
      $region10: #{tpu_custom_call.1} parent=5 // pred_check_branch
        %137 = sbr.rel (%p134) target = $region12
      $region11: #{tpu_custom_call.1} parent=5 // pred_region
        %s138 = ssub.s32 %s26, 1
      $region12: #{tpu_custom_call.1} parent=5 // pred_fallthru
        _
      %p139 = scmp.lt.s32.totalorder %s26, 10
      // Predicated region
      $region13: #{tpu_custom_call.1} parent=5 // pred_check
        %p140 = pneg %p139
      $region14: #{tpu_custom_call.1} parent=5 // pred_check_branch
        %142 = sbr.rel (%p140) target = $region16
      $region15: #{tpu_custom_call.1} parent=5 // pred_region
        // Predicated region
        $region17: #{tpu_custom_call.1} parent=15 // pred_check
          %p143 = pneg %p66
        $region18: #{tpu_custom_call.1} parent=15 // pred_check_branch
          %145 = sbr.rel (%p143) target = $region20
        $region19: #{tpu_custom_call.1} parent=15 // pred_region
          %s146 = sld [smem:[#allocation4 + %s33]]
          %s147 = sadd.s32 %s146, %s34
          %p148 = scmp.lt.s32.totalorder %s147, 7
          %s149 = scalar_select %p148, %s147, 7
          %s150 = smul.u32 32, %s149
          %p151 = scmp.lt.s32.totalorder %s150, 255
          %s152 = scalar_select %p151, %s150, 255
          %s153 = smul.addr %s152, 8
          %s154 = scalar_lea.vmem %s2, %s153
          %s155 = sld [smem:[#allocation4 + %s33]]
          %s156 = sadd.s32 %s155, %s34
          %p157 = scmp.lt.s32.totalorder %s156, 7
          %s158 = scalar_select %p157, %s156, 7
          %s159 = smul.u32 32, %s158
        $region20: #{tpu_custom_call.1} parent=15 // pred_fallthru
          _
        // Predicated region
        $region21: #{tpu_custom_call.1} parent=15 // pred_check
          %p160 = pneg %p92
        $region22: #{tpu_custom_call.1} parent=15 // pred_check_branch
          %162 = sbr.rel (%p160) target = $region24
        $region23: #{tpu_custom_call.1} parent=15 // pred_region
          %s163 = smul.u32 2, %s33
          %p164 = scmp.lt.s32.totalorder %s163, 3
          %s165 = scalar_select %p164, %s163, 3
          %s166 = smul.addr %s165, 8
          %s167 = scalar_lea.vmem %s3, %s166
          %s168 = smul.u32 2, %s33
        $region24: #{tpu_custom_call.1} parent=15 // pred_fallthru
          _
      $region16: #{tpu_custom_call.1} parent=5 // pred_fallthru
        _
      %p169 = scmp.le.s32.totalorder 1, %s26
      %p170 = scmp.lt.s32.totalorder %s26, 11
      %p171 = pnand %p169, %p170
      %p172 = pneg %p171
      // Predicated region
      $region25: #{tpu_custom_call.1} parent=5 // pred_check
        _
      $region26: #{tpu_custom_call.1} parent=5 // pred_check_branch
        %174 = sbr.rel (%p171) target = $region28
      $region27: #{tpu_custom_call.1} parent=5 // pred_region
        %s175 = ssub.s32 %s26, 1
        %s176 = sld [smem:[#allocation4 + %s35]]
        %s177 = sadd.s32 %s176, %s36
        %p178 = scmp.lt.s32.totalorder %s177, 7
        %s179 = scalar_select %p178, %s177, 7
        %s180 = smul.u32 32, %s179
        %p181 = scmp.lt.s32.totalorder %s180, 255
        %s182 = scalar_select %p181, %s180, 255
        %s183 = smul.addr %s182, 8
        %s184 = scalar_lea.vmem %s2, %s183
        %p185 = pneg %p72
        %p186 = pneg %p69
        %s187 = smul.u32 2, %s35
        %p188 = scmp.lt.s32.totalorder %s187, 3
        %s189 = scalar_select %p188, %s187, 3
        %s190 = smul.addr %s189, 8
        %s191 = scalar_lea.vmem %s3, %s190
        %p192 = pneg %p98
        %p193 = pneg %p95
        %p194 = pneg %p124
        %p195 = pneg %p121
        %s196 = sand.u32 %s111, 1
        %s197 = scalar_lea.sflag [#allocation7], %s196
        %s198 = sand.u32 %s111, 1
        %s199 = smul.addr %s198, 2
        %s200 = scalar_lea.vmem [#allocation6], %s199
        %s201 = sld [smem:[#allocation4 + %s35]]
        %s202 = sadd.s32 %s201, %s36
        %p203 = scmp.lt.s32.totalorder %s202, 7
        %s204 = scalar_select %p203, %s202, 7
        %s205 = smul.u32 32, %s204
        %p206 = scmp.lt.s32.totalorder %s205, 255
        %s207 = scalar_select %p206, %s205, 255
        %s208 = smul.addr %s207, 8
        %s209 = scalar_lea.vmem %s2, %s208
        %s210 = sld [smem:[#allocation4 + %s35]]
        %s211 = sadd.s32 %s210, %s36
        %p212 = scmp.lt.s32.totalorder %s211, 7
        %s213 = scalar_select %p212, %s211, 7
        %s214 = smul.u32 32, %s213
        %s215 = smul.u32 2, %s35
        %p216 = scmp.lt.s32.totalorder %s215, 3
        %s217 = scalar_select %p216, %s215, 3
        %s218 = smul.addr %s217, 8
        %s219 = scalar_lea.vmem %s3, %s218
        %s220 = smul.u32 2, %s35
        %s221 = smul.u32 2, %s35
        %p222 = scmp.eq.s32.totalorder %s36, 0
        // Predicated region
        $region29: #{tpu_custom_call.1} parent=27 // pred_check
          %p223 = pneg %p222
        $region30: #{tpu_custom_call.1} parent=27 // pred_check_branch
          %225 = sbr.rel (%p223) target = $region32
        $region31: #{tpu_custom_call.1} parent=27 // pred_region
          %226 = vst [vmem:[#allocation2] sm:$0xff] -inf
        $region32: #{tpu_custom_call.1} parent=27 // pred_fallthru
          _
        %s227 = sld [smem:[#allocation5 + %s35]]
        %p228 = scmp.lt.s32.totalorder %s36, %s227
        // Predicated region
        $region33: #{tpu_custom_call.1} parent=27 // pred_check
          %p229 = pneg %p228
        $region34: #{tpu_custom_call.1} parent=27 // pred_check_branch
          %231 = sbr.rel (%p229) target = $region36
        $region35: #{tpu_custom_call.1} parent=27 // pred_region
          %v232 = vld [vmem:[%s209] sm:$0xff]
          %v233 = vld [vmem:[%s209 + $0x8] sm:$0xff]
          %v234 = vld [vmem:[%s209 + $0x10] sm:$0xff]
          %v235 = vld [vmem:[%s209 + $0x18] sm:$0xff]
          %v236 = vld [vmem:[%s209 + $0x20] sm:$0xff]
          %v237 = vld [vmem:[%s209 + $0x28] sm:$0xff]
          %v238 = vld [vmem:[%s209 + $0x30] sm:$0xff]
          %v239 = vld [vmem:[%s209 + $0x38] sm:$0xff]
          %v240 = vld [vmem:[%s209 + $0x40] sm:$0xff]
          %v241 = vld [vmem:[%s209 + $0x48] sm:$0xff]
          %v242 = vld [vmem:[%s209 + $0x50] sm:$0xff]
          %v243 = vld [vmem:[%s209 + $0x58] sm:$0xff]
          %v244 = vld [vmem:[%s209 + $0x60] sm:$0xff]
          %v245 = vld [vmem:[%s209 + $0x68] sm:$0xff]
          %v246 = vld [vmem:[%s209 + $0x70] sm:$0xff]
          %v247 = vld [vmem:[%s209 + $0x78] sm:$0xff]
          %v248 = vld [vmem:[%s209 + $0x80] sm:$0xff]
          %v249 = vld [vmem:[%s209 + $0x88] sm:$0xff]
          %v250 = vld [vmem:[%s209 + $0x90] sm:$0xff]
          %v251 = vld [vmem:[%s209 + $0x98] sm:$0xff]
          %v252 = vld [vmem:[%s209 + $0xa0] sm:$0xff]
          %v253 = vld [vmem:[%s209 + $0xa8] sm:$0xff]
          %v254 = vld [vmem:[%s209 + $0xb0] sm:$0xff]
          %v255 = vld [vmem:[%s209 + $0xb8] sm:$0xff]
          %v256 = vld [vmem:[%s209 + $0xc0] sm:$0xff]
          %v257 = vld [vmem:[%s209 + $0xc8] sm:$0xff]
          %v258 = vld [vmem:[%s209 + $0xd0] sm:$0xff]
          %v259 = vld [vmem:[%s209 + $0xd8] sm:$0xff]
          %v260 = vld [vmem:[%s209 + $0xe0] sm:$0xff]
          %v261 = vld [vmem:[%s209 + $0xe8] sm:$0xff]
          %v262 = vld [vmem:[%s209 + $0xf0] sm:$0xff]
          %v263 = vld [vmem:[%s209 + $0xf8] sm:$0xff]
          %s296 = smul.u32 %s35, 256
          %v297 = vlaneseq
          %v298 = vand.u32 %v297, 127
          %v299 = vadd.s32 %v298, 128
          %v300 = vstv %s296
          %v301 = vadd.s32 %v300, %v298
          %v302 = vadd.s32 %v300, %v299
          %303 = vset.pattern.permute.xlu0 2
          %304 = vperm.xlu0 %303, %v232
          %v305 = vpop.permute.xlu0 %304
          %306 = vset.pattern.permute.xlu0 2
          %307 = vperm.xlu0 %306, %v233
          %v308 = vpop.permute.xlu0 %307
          %309 = vset.pattern.permute.xlu0 2
          %310 = vperm.xlu0 %309, %v234
          %v311 = vpop.permute.xlu0 %310
          %312 = vset.pattern.permute.xlu0 2
          %313 = vperm.xlu0 %312, %v235
          %v314 = vpop.permute.xlu0 %313
          %315 = vset.pattern.permute.xlu0 2
          %316 = vperm.xlu0 %315, %v236
          %v317 = vpop.permute.xlu0 %316
          %318 = vset.pattern.permute.xlu0 2
          %319 = vperm.xlu0 %318, %v237
          %v320 = vpop.permute.xlu0 %319
          %321 = vset.pattern.permute.xlu0 2
          %322 = vperm.xlu0 %321, %v238
          %v323 = vpop.permute.xlu0 %322
          %324 = vset.pattern.permute.xlu0 2
          %325 = vperm.xlu0 %324, %v239
          %v326 = vpop.permute.xlu0 %325
          %327 = vset.pattern.permute.xlu0 2
          %328 = vperm.xlu0 %327, %v240
          %v329 = vpop.permute.xlu0 %328
          %330 = vset.pattern.permute.xlu0 2
          %331 = vperm.xlu0 %330, %v241
          %v332 = vpop.permute.xlu0 %331
          %333 = vset.pattern.permute.xlu0 2
          %334 = vperm.xlu0 %333, %v242
          %v335 = vpop.permute.xlu0 %334
          %336 = vset.pattern.permute.xlu0 2
          %337 = vperm.xlu0 %336, %v243
          %v338 = vpop.permute.xlu0 %337
          %339 = vset.pattern.permute.xlu0 2
          %340 = vperm.xlu0 %339, %v244
          %v341 = vpop.permute.xlu0 %340
          %342 = vset.pattern.permute.xlu0 2
          %343 = vperm.xlu0 %342, %v245
          %v344 = vpop.permute.xlu0 %343
          %345 = vset.pattern.permute.xlu0 2
          %346 = vperm.xlu0 %345, %v246
          %v347 = vpop.permute.xlu0 %346
          %348 = vset.pattern.permute.xlu0 2
          %349 = vperm.xlu0 %348, %v247
          %v350 = vpop.permute.xlu0 %349
          %351 = vset.pattern.permute.xlu0 2
          %352 = vperm.xlu0 %351, %v248
          %v353 = vpop.permute.xlu0 %352
          %354 = vset.pattern.permute.xlu0 2
          %355 = vperm.xlu0 %354, %v249
          %v356 = vpop.permute.xlu0 %355
          %357 = vset.pattern.permute.xlu0 2
          %358 = vperm.xlu0 %357, %v250
          %v359 = vpop.permute.xlu0 %358
          %360 = vset.pattern.permute.xlu0 2
          %361 = vperm.xlu0 %360, %v251
          %v362 = vpop.permute.xlu0 %361
          %363 = vset.pattern.permute.xlu0 2
          %364 = vperm.xlu0 %363, %v252
          %v365 = vpop.permute.xlu0 %364
          %366 = vset.pattern.permute.xlu0 2
          %367 = vperm.xlu0 %366, %v253
          %v368 = vpop.permute.xlu0 %367
          %369 = vset.pattern.permute.xlu0 2
          %370 = vperm.xlu0 %369, %v254
          %v371 = vpop.permute.xlu0 %370
          %372 = vset.pattern.permute.xlu0 2
          %373 = vperm.xlu0 %372, %v255
          %v374 = vpop.permute.xlu0 %373
          %375 = vset.pattern.permute.xlu0 2
          %376 = vperm.xlu0 %375, %v256
          %v377 = vpop.permute.xlu0 %376
          %378 = vset.pattern.permute.xlu0 2
          %379 = vperm.xlu0 %378, %v257
          %v380 = vpop.permute.xlu0 %379
          %381 = vset.pattern.permute.xlu0 2
          %382 = vperm.xlu0 %381, %v258
          %v383 = vpop.permute.xlu0 %382
          %384 = vset.pattern.permute.xlu0 2
          %385 = vperm.xlu0 %384, %v259
          %v386 = vpop.permute.xlu0 %385
          %387 = vset.pattern.permute.xlu0 2
          %388 = vperm.xlu0 %387, %v260
          %v389 = vpop.permute.xlu0 %388
          %390 = vset.pattern.permute.xlu0 2
          %391 = vperm.xlu0 %390, %v261
          %v392 = vpop.permute.xlu0 %391
          %393 = vset.pattern.permute.xlu0 2
          %394 = vperm.xlu0 %393, %v262
          %v395 = vpop.permute.xlu0 %394
          %396 = vset.pattern.permute.xlu0 2
          %397 = vperm.xlu0 %396, %v263
          %v398 = vpop.permute.xlu0 %397
          %vm399 = vcmp.eq.s32.totalorder %v305, %v301
          %vm400 = vcmp.eq.s32.totalorder %v305, %v302
          %vm401 = vcmp.eq.s32.totalorder %v308, %v301
          %vm402 = vcmp.eq.s32.totalorder %v308, %v302
          %vm403 = vcmp.eq.s32.totalorder %v311, %v301
          %vm404 = vcmp.eq.s32.totalorder %v311, %v302
          %vm405 = vcmp.eq.s32.totalorder %v314, %v301
          %vm406 = vcmp.eq.s32.totalorder %v314, %v302
          %vm407 = vcmp.eq.s32.totalorder %v317, %v301
          %vm408 = vcmp.eq.s32.totalorder %v317, %v302
          %vm409 = vcmp.eq.s32.totalorder %v320, %v301
          %vm410 = vcmp.eq.s32.totalorder %v320, %v302
          %vm411 = vcmp.eq.s32.totalorder %v323, %v301
          %vm412 = vcmp.eq.s32.totalorder %v323, %v302
          %vm413 = vcmp.eq.s32.totalorder %v326, %v301
          %vm414 = vcmp.eq.s32.totalorder %v326, %v302
          %vm415 = vcmp.eq.s32.totalorder %v329, %v301
          %vm416 = vcmp.eq.s32.totalorder %v329, %v302
          %vm417 = vcmp.eq.s32.totalorder %v332, %v301
          %vm418 = vcmp.eq.s32.totalorder %v332, %v302
          %vm419 = vcmp.eq.s32.totalorder %v335, %v301
          %vm420 = vcmp.eq.s32.totalorder %v335, %v302
          %vm421 = vcmp.eq.s32.totalorder %v338, %v301
          %vm422 = vcmp.eq.s32.totalorder %v338, %v302
          %vm423 = vcmp.eq.s32.totalorder %v341, %v301
          %vm424 = vcmp.eq.s32.totalorder %v341, %v302
          %vm425 = vcmp.eq.s32.totalorder %v344, %v301
          %vm426 = vcmp.eq.s32.totalorder %v344, %v302
          %vm427 = vcmp.eq.s32.totalorder %v347, %v301
          %vm428 = vcmp.eq.s32.totalorder %v347, %v302
          %vm429 = vcmp.eq.s32.totalorder %v350, %v301
          %vm430 = vcmp.eq.s32.totalorder %v350, %v302
          %vm431 = vcmp.eq.s32.totalorder %v353, %v301
          %vm432 = vcmp.eq.s32.totalorder %v353, %v302
          %vm433 = vcmp.eq.s32.totalorder %v356, %v301
          %vm434 = vcmp.eq.s32.totalorder %v356, %v302
          %vm435 = vcmp.eq.s32.totalorder %v359, %v301
          %vm436 = vcmp.eq.s32.totalorder %v359, %v302
          %vm437 = vcmp.eq.s32.totalorder %v362, %v301
          %vm438 = vcmp.eq.s32.totalorder %v362, %v302
          %vm439 = vcmp.eq.s32.totalorder %v365, %v301
          %vm440 = vcmp.eq.s32.totalorder %v365, %v302
          %vm441 = vcmp.eq.s32.totalorder %v368, %v301
          %vm442 = vcmp.eq.s32.totalorder %v368, %v302
          %vm443 = vcmp.eq.s32.totalorder %v371, %v301
          %vm444 = vcmp.eq.s32.totalorder %v371, %v302
          %vm445 = vcmp.eq.s32.totalorder %v374, %v301
          %vm446 = vcmp.eq.s32.totalorder %v374, %v302
          %vm447 = vcmp.eq.s32.totalorder %v377, %v301
          %vm448 = vcmp.eq.s32.totalorder %v377, %v302
          %vm449 = vcmp.eq.s32.totalorder %v380, %v301
          %vm450 = vcmp.eq.s32.totalorder %v380, %v302
          %vm451 = vcmp.eq.s32.totalorder %v383, %v301
          %vm452 = vcmp.eq.s32.totalorder %v383, %v302
          %vm453 = vcmp.eq.s32.totalorder %v386, %v301
          %vm454 = vcmp.eq.s32.totalorder %v386, %v302
          %vm455 = vcmp.eq.s32.totalorder %v389, %v301
          %vm456 = vcmp.eq.s32.totalorder %v389, %v302
          %vm457 = vcmp.eq.s32.totalorder %v392, %v301
          %vm458 = vcmp.eq.s32.totalorder %v392, %v302
          %vm459 = vcmp.eq.s32.totalorder %v395, %v301
          %vm460 = vcmp.eq.s32.totalorder %v395, %v302
          %vm461 = vcmp.eq.s32.totalorder %v398, %v301
          %vm462 = vcmp.eq.s32.totalorder %v398, %v302
          %463 = vset.pattern.permute.xlu0 0
          %464 = vperm.xlu0 %463, %v232
          %v465 = vpop.permute.xlu0 %464
          %467 = vset.pattern.permute.xlu0 0
          %468 = vperm.xlu0 %467, %v233
          %v469 = vpop.permute.xlu0 %468
          %471 = vset.pattern.permute.xlu0 0
          %472 = vperm.xlu0 %471, %v234
          %v473 = vpop.permute.xlu0 %472
          %475 = vset.pattern.permute.xlu0 0
          %476 = vperm.xlu0 %475, %v235
          %v477 = vpop.permute.xlu0 %476
          %479 = vset.pattern.permute.xlu0 0
          %480 = vperm.xlu0 %479, %v236
          %v481 = vpop.permute.xlu0 %480
          %483 = vset.pattern.permute.xlu0 0
          %484 = vperm.xlu0 %483, %v237
          %v485 = vpop.permute.xlu0 %484
          %487 = vset.pattern.permute.xlu0 0
          %488 = vperm.xlu0 %487, %v238
          %v489 = vpop.permute.xlu0 %488
          %491 = vset.pattern.permute.xlu0 0
          %492 = vperm.xlu0 %491, %v239
          %v493 = vpop.permute.xlu0 %492
          %495 = vset.pattern.permute.xlu0 0
          %496 = vperm.xlu0 %495, %v240
          %v497 = vpop.permute.xlu0 %496
          %499 = vset.pattern.permute.xlu0 0
          %500 = vperm.xlu0 %499, %v241
          %v501 = vpop.permute.xlu0 %500
          %503 = vset.pattern.permute.xlu0 0
          %504 = vperm.xlu0 %503, %v242
          %v505 = vpop.permute.xlu0 %504
          %507 = vset.pattern.permute.xlu0 0
          %508 = vperm.xlu0 %507, %v243
          %v509 = vpop.permute.xlu0 %508
          %511 = vset.pattern.permute.xlu0 0
          %512 = vperm.xlu0 %511, %v244
          %v513 = vpop.permute.xlu0 %512
          %515 = vset.pattern.permute.xlu0 0
          %516 = vperm.xlu0 %515, %v245
          %v517 = vpop.permute.xlu0 %516
          %519 = vset.pattern.permute.xlu0 0
          %520 = vperm.xlu0 %519, %v246
          %v521 = vpop.permute.xlu0 %520
          %523 = vset.pattern.permute.xlu0 0
          %524 = vperm.xlu0 %523, %v247
          %v525 = vpop.permute.xlu0 %524
          %527 = vset.pattern.permute.xlu0 0
          %528 = vperm.xlu0 %527, %v248
          %v529 = vpop.permute.xlu0 %528
          %531 = vset.pattern.permute.xlu0 0
          %532 = vperm.xlu0 %531, %v249
          %v533 = vpop.permute.xlu0 %532
          %535 = vset.pattern.permute.xlu0 0
          %536 = vperm.xlu0 %535, %v250
          %v537 = vpop.permute.xlu0 %536
          %539 = vset.pattern.permute.xlu0 0
          %540 = vperm.xlu0 %539, %v251
          %v541 = vpop.permute.xlu0 %540
          %543 = vset.pattern.permute.xlu0 0
          %544 = vperm.xlu0 %543, %v252
          %v545 = vpop.permute.xlu0 %544
          %547 = vset.pattern.permute.xlu0 0
          %548 = vperm.xlu0 %547, %v253
          %v549 = vpop.permute.xlu0 %548
          %551 = vset.pattern.permute.xlu0 0
          %552 = vperm.xlu0 %551, %v254
          %v553 = vpop.permute.xlu0 %552
          %555 = vset.pattern.permute.xlu0 0
          %556 = vperm.xlu0 %555, %v255
          %v557 = vpop.permute.xlu0 %556
          %559 = vset.pattern.permute.xlu0 0
          %560 = vperm.xlu0 %559, %v256
          %v561 = vpop.permute.xlu0 %560
          %563 = vset.pattern.permute.xlu0 0
          %564 = vperm.xlu0 %563, %v257
          %v565 = vpop.permute.xlu0 %564
          %567 = vset.pattern.permute.xlu0 0
          %568 = vperm.xlu0 %567, %v258
          %v569 = vpop.permute.xlu0 %568
          %571 = vset.pattern.permute.xlu0 0
          %572 = vperm.xlu0 %571, %v259
          %v573 = vpop.permute.xlu0 %572
          %575 = vset.pattern.permute.xlu0 0
          %576 = vperm.xlu0 %575, %v260
          %v577 = vpop.permute.xlu0 %576
          %579 = vset.pattern.permute.xlu0 0
          %580 = vperm.xlu0 %579, %v261
          %v581 = vpop.permute.xlu0 %580
          %583 = vset.pattern.permute.xlu0 0
          %584 = vperm.xlu0 %583, %v262
          %v585 = vpop.permute.xlu0 %584
          %587 = vset.pattern.permute.xlu0 0
          %588 = vperm.xlu0 %587, %v263
          %v589 = vpop.permute.xlu0 %588
          %v591 = vsel %vm399, %v465, -inf
          %v592 = vsel %vm400, %v465, -inf
          %v593 = vsel %vm401, %v469, -inf
          %v594 = vsel %vm402, %v469, -inf
          %v595 = vsel %vm403, %v473, -inf
          %v596 = vsel %vm404, %v473, -inf
          %v597 = vsel %vm405, %v477, -inf
          %v598 = vsel %vm406, %v477, -inf
          %v599 = vsel %vm407, %v481, -inf
          %v600 = vsel %vm408, %v481, -inf
          %v601 = vsel %vm409, %v485, -inf
          %v602 = vsel %vm410, %v485, -inf
          %v603 = vsel %vm411, %v489, -inf
          %v604 = vsel %vm412, %v489, -inf
          %v605 = vsel %vm413, %v493, -inf
          %v606 = vsel %vm414, %v493, -inf
          %v607 = vsel %vm415, %v497, -inf
          %v608 = vsel %vm416, %v497, -inf
          %v609 = vsel %vm417, %v501, -inf
          %v610 = vsel %vm418, %v501, -inf
          %v611 = vsel %vm419, %v505, -inf
          %v612 = vsel %vm420, %v505, -inf
          %v613 = vsel %vm421, %v509, -inf
          %v614 = vsel %vm422, %v509, -inf
          %v615 = vsel %vm423, %v513, -inf
          %v616 = vsel %vm424, %v513, -inf
          %v617 = vsel %vm425, %v517, -inf
          %v618 = vsel %vm426, %v517, -inf
          %v619 = vsel %vm427, %v521, -inf
          %v620 = vsel %vm428, %v521, -inf
          %v621 = vsel %vm429, %v525, -inf
          %v622 = vsel %vm430, %v525, -inf
          %v623 = vsel %vm431, %v529, -inf
          %v624 = vsel %vm432, %v529, -inf
          %v625 = vsel %vm433, %v533, -inf
          %v626 = vsel %vm434, %v533, -inf
          %v627 = vsel %vm435, %v537, -inf
          %v628 = vsel %vm436, %v537, -inf
          %v629 = vsel %vm437, %v541, -inf
          %v630 = vsel %vm438, %v541, -inf
          %v631 = vsel %vm439, %v545, -inf
          %v632 = vsel %vm440, %v545, -inf
          %v633 = vsel %vm441, %v549, -inf
          %v634 = vsel %vm442, %v549, -inf
          %v635 = vsel %vm443, %v553, -inf
          %v636 = vsel %vm444, %v553, -inf
          %v637 = vsel %vm445, %v557, -inf
          %v638 = vsel %vm446, %v557, -inf
          %v639 = vsel %vm447, %v561, -inf
          %v640 = vsel %vm448, %v561, -inf
          %v641 = vsel %vm449, %v565, -inf
          %v642 = vsel %vm450, %v565, -inf
          %v643 = vsel %vm451, %v569, -inf
          %v644 = vsel %vm452, %v569, -inf
          %v645 = vsel %vm453, %v573, -inf
          %v646 = vsel %vm454, %v573, -inf
          %v647 = vsel %vm455, %v577, -inf
          %v648 = vsel %vm456, %v577, -inf
          %v649 = vsel %vm457, %v581, -inf
          %v650 = vsel %vm458, %v581, -inf
          %v651 = vsel %vm459, %v585, -inf
          %v652 = vsel %vm460, %v585, -inf
          %v653 = vsel %vm461, %v589, -inf
          %v654 = vsel %vm462, %v589, -inf
          %v655 = vmax.f32 %v591, %v595
          %v656 = vmax.f32 %v593, %v597
          %v657 = vmax.f32 %v655, %v599
          %v658 = vmax.f32 %v656, %v601
          %v659 = vmax.f32 %v657, %v603
          %v660 = vmax.f32 %v658, %v605
          %v661 = vmax.f32 %v659, %v607
          %v662 = vmax.f32 %v660, %v609
          %v663 = vmax.f32 %v661, %v611
          %v664 = vmax.f32 %v662, %v613
          %v665 = vmax.f32 %v663, %v615
          %v666 = vmax.f32 %v664, %v617
          %v667 = vmax.f32 %v665, %v619
          %v668 = vmax.f32 %v666, %v621
          %v669 = vmax.f32 %v667, %v623
          %v670 = vmax.f32 %v668, %v625
          %v671 = vmax.f32 %v669, %v627
          %v672 = vmax.f32 %v670, %v629
          %v673 = vmax.f32 %v671, %v631
          %v674 = vmax.f32 %v672, %v633
          %v675 = vmax.f32 %v673, %v635
          %v676 = vmax.f32 %v674, %v637
          %v677 = vmax.f32 %v675, %v639
          %v678 = vmax.f32 %v676, %v641
          %v679 = vmax.f32 %v677, %v643
          %v680 = vmax.f32 %v678, %v645
          %v681 = vmax.f32 %v679, %v647
          %v682 = vmax.f32 %v680, %v649
          %v683 = vmax.f32 %v681, %v651
          %v684 = vmax.f32 %v682, %v653
          %v685 = vmax.f32 %v683, %v684
          %v686 = vrot.slane %v685, 4
          %v687 = vmax.f32 %v685, %v686
          %v688 = vrot.slane %v687, 2
          %v689 = vmax.f32 %v687, %v688
          %v690 = vrot.slane %v689, 1
          %v691 = vmax.f32 %v689, %v690
          %v692 = vmax.f32 %v592, %v596
          %v693 = vmax.f32 %v594, %v598
          %v694 = vmax.f32 %v692, %v600
          %v695 = vmax.f32 %v693, %v602
          %v696 = vmax.f32 %v694, %v604
          %v697 = vmax.f32 %v695, %v606
          %v698 = vmax.f32 %v696, %v608
          %v699 = vmax.f32 %v697, %v610
          %v700 = vmax.f32 %v698, %v612
          %v701 = vmax.f32 %v699, %v614
          %v702 = vmax.f32 %v700, %v616
          %v703 = vmax.f32 %v701, %v618
          %v704 = vmax.f32 %v702, %v620
          %v705 = vmax.f32 %v703, %v622
          %v706 = vmax.f32 %v704, %v624
          %v707 = vmax.f32 %v705, %v626
          %v708 = vmax.f32 %v706, %v628
          %v709 = vmax.f32 %v707, %v630
          %v710 = vmax.f32 %v708, %v632
          %v711 = vmax.f32 %v709, %v634
          %v712 = vmax.f32 %v710, %v636
          %v713 = vmax.f32 %v711, %v638
          %v714 = vmax.f32 %v712, %v640
          %v715 = vmax.f32 %v713, %v642
          %v716 = vmax.f32 %v714, %v644
          %v717 = vmax.f32 %v715, %v646
          %v718 = vmax.f32 %v716, %v648
          %v719 = vmax.f32 %v717, %v650
          %v720 = vmax.f32 %v718, %v652
          %v721 = vmax.f32 %v719, %v654
          %v722 = vmax.f32 %v720, %v721
          %v723 = vrot.slane %v722, 4
          %v724 = vmax.f32 %v722, %v723
          %v725 = vrot.slane %v724, 2
          %v726 = vmax.f32 %v724, %v725
          %v727 = vrot.slane %v726, 1
          %v728 = vmax.f32 %v726, %v727
          %v729 = vsub.f32 0.0, %v232
          %v730 = vsub.f32 0.0, %v233
          %v731 = vsub.f32 0.0, %v234
          %v732 = vsub.f32 0.0, %v235
          %v733 = vsub.f32 0.0, %v236
          %v734 = vsub.f32 0.0, %v237
          %v735 = vsub.f32 0.0, %v238
          %v736 = vsub.f32 0.0, %v239
          %v737 = vsub.f32 0.0, %v240
          %v738 = vsub.f32 0.0, %v241
          %v739 = vsub.f32 0.0, %v242
          %v740 = vsub.f32 0.0, %v243
          %v741 = vsub.f32 0.0, %v244
          %v742 = vsub.f32 0.0, %v245
          %v743 = vsub.f32 0.0, %v246
          %v744 = vsub.f32 0.0, %v247
          %v745 = vsub.f32 0.0, %v248
          %v746 = vsub.f32 0.0, %v249
          %v747 = vsub.f32 0.0, %v250
          %v748 = vsub.f32 0.0, %v251
          %v749 = vsub.f32 0.0, %v252
          %v750 = vsub.f32 0.0, %v253
          %v751 = vsub.f32 0.0, %v254
          %v752 = vsub.f32 0.0, %v255
          %v753 = vsub.f32 0.0, %v256
          %v754 = vsub.f32 0.0, %v257
          %v755 = vsub.f32 0.0, %v258
          %v756 = vsub.f32 0.0, %v259
          %v757 = vsub.f32 0.0, %v260
          %v758 = vsub.f32 0.0, %v261
          %v759 = vsub.f32 0.0, %v262
          %v760 = vsub.f32 0.0, %v263
          %762 = vset.pattern.permute.xlu0 0
          %763 = vperm.xlu0 %762, %v729
          %v764 = vpop.permute.xlu0 %763
          %767 = vset.pattern.permute.xlu0 0
          %768 = vperm.xlu0 %767, %v730
          %v769 = vpop.permute.xlu0 %768
          %772 = vset.pattern.permute.xlu0 0
          %773 = vperm.xlu0 %772, %v731
          %v774 = vpop.permute.xlu0 %773
          %777 = vset.pattern.permute.xlu0 0
          %778 = vperm.xlu0 %777, %v732
          %v779 = vpop.permute.xlu0 %778
          %782 = vset.pattern.permute.xlu0 0
          %783 = vperm.xlu0 %782, %v733
          %v784 = vpop.permute.xlu0 %783
          %787 = vset.pattern.permute.xlu0 0
          %788 = vperm.xlu0 %787, %v734
          %v789 = vpop.permute.xlu0 %788
          %792 = vset.pattern.permute.xlu0 0
          %793 = vperm.xlu0 %792, %v735
          %v794 = vpop.permute.xlu0 %793
          %797 = vset.pattern.permute.xlu0 0
          %798 = vperm.xlu0 %797, %v736
          %v799 = vpop.permute.xlu0 %798
          %802 = vset.pattern.permute.xlu0 0
          %803 = vperm.xlu0 %802, %v737
          %v804 = vpop.permute.xlu0 %803
          %807 = vset.pattern.permute.xlu0 0
          %808 = vperm.xlu0 %807, %v738
          %v809 = vpop.permute.xlu0 %808
          %812 = vset.pattern.permute.xlu0 0
          %813 = vperm.xlu0 %812, %v739
          %v814 = vpop.permute.xlu0 %813
          %817 = vset.pattern.permute.xlu0 0
          %818 = vperm.xlu0 %817, %v740
          %v819 = vpop.permute.xlu0 %818
          %822 = vset.pattern.permute.xlu0 0
          %823 = vperm.xlu0 %822, %v741
          %v824 = vpop.permute.xlu0 %823
          %827 = vset.pattern.permute.xlu0 0
          %828 = vperm.xlu0 %827, %v742
          %v829 = vpop.permute.xlu0 %828
          %832 = vset.pattern.permute.xlu0 0
          %833 = vperm.xlu0 %832, %v743
          %v834 = vpop.permute.xlu0 %833
          %837 = vset.pattern.permute.xlu0 0
          %838 = vperm.xlu0 %837, %v744
          %v839 = vpop.permute.xlu0 %838
          %842 = vset.pattern.permute.xlu0 0
          %843 = vperm.xlu0 %842, %v745
          %v844 = vpop.permute.xlu0 %843
          %847 = vset.pattern.permute.xlu0 0
          %848 = vperm.xlu0 %847, %v746
          %v849 = vpop.permute.xlu0 %848
          %852 = vset.pattern.permute.xlu0 0
          %853 = vperm.xlu0 %852, %v747
          %v854 = vpop.permute.xlu0 %853
          %857 = vset.pattern.permute.xlu0 0
          %858 = vperm.xlu0 %857, %v748
          %v859 = vpop.permute.xlu0 %858
          %862 = vset.pattern.permute.xlu0 0
          %863 = vperm.xlu0 %862, %v749
          %v864 = vpop.permute.xlu0 %863
          %867 = vset.pattern.permute.xlu0 0
          %868 = vperm.xlu0 %867, %v750
          %v869 = vpop.permute.xlu0 %868
          %872 = vset.pattern.permute.xlu0 0
          %873 = vperm.xlu0 %872, %v751
          %v874 = vpop.permute.xlu0 %873
          %877 = vset.pattern.permute.xlu0 0
          %878 = vperm.xlu0 %877, %v752
          %v879 = vpop.permute.xlu0 %878
          %882 = vset.pattern.permute.xlu0 0
          %883 = vperm.xlu0 %882, %v753
          %v884 = vpop.permute.xlu0 %883
          %887 = vset.pattern.permute.xlu0 0
          %888 = vperm.xlu0 %887, %v754
          %v889 = vpop.permute.xlu0 %888
          %892 = vset.pattern.permute.xlu0 0
          %893 = vperm.xlu0 %892, %v755
          %v894 = vpop.permute.xlu0 %893
          %897 = vset.pattern.permute.xlu0 0
          %898 = vperm.xlu0 %897, %v756
          %v899 = vpop.permute.xlu0 %898
          %902 = vset.pattern.permute.xlu0 0
          %903 = vperm.xlu0 %902, %v757
          %v904 = vpop.permute.xlu0 %903
          %907 = vset.pattern.permute.xlu0 0
          %908 = vperm.xlu0 %907, %v758
          %v909 = vpop.permute.xlu0 %908
          %912 = vset.pattern.permute.xlu0 0
          %913 = vperm.xlu0 %912, %v759
          %v914 = vpop.permute.xlu0 %913
          %917 = vset.pattern.permute.xlu0 0
          %918 = vperm.xlu0 %917, %v760
          %v919 = vpop.permute.xlu0 %918
          %v921 = vsel %vm399, %v764, -inf
          %v922 = vsel %vm400, %v764, -inf
          %v923 = vsel %vm401, %v769, -inf
          %v924 = vsel %vm402, %v769, -inf
          %v925 = vsel %vm403, %v774, -inf
          %v926 = vsel %vm404, %v774, -inf
          %v927 = vsel %vm405, %v779, -inf
          %v928 = vsel %vm406, %v779, -inf
          %v929 = vsel %vm407, %v784, -inf
          %v930 = vsel %vm408, %v784, -inf
          %v931 = vsel %vm409, %v789, -inf
          %v932 = vsel %vm410, %v789, -inf
          %v933 = vsel %vm411, %v794, -inf
          %v934 = vsel %vm412, %v794, -inf
          %v935 = vsel %vm413, %v799, -inf
          %v936 = vsel %vm414, %v799, -inf
          %v937 = vsel %vm415, %v804, -inf
          %v938 = vsel %vm416, %v804, -inf
          %v939 = vsel %vm417, %v809, -inf
          %v940 = vsel %vm418, %v809, -inf
          %v941 = vsel %vm419, %v814, -inf
          %v942 = vsel %vm420, %v814, -inf
          %v943 = vsel %vm421, %v819, -inf
          %v944 = vsel %vm422, %v819, -inf
          %v945 = vsel %vm423, %v824, -inf
          %v946 = vsel %vm424, %v824, -inf
          %v947 = vsel %vm425, %v829, -inf
          %v948 = vsel %vm426, %v829, -inf
          %v949 = vsel %vm427, %v834, -inf
          %v950 = vsel %vm428, %v834, -inf
          %v951 = vsel %vm429, %v839, -inf
          %v952 = vsel %vm430, %v839, -inf
          %v953 = vsel %vm431, %v844, -inf
          %v954 = vsel %vm432, %v844, -inf
          %v955 = vsel %vm433, %v849, -inf
          %v956 = vsel %vm434, %v849, -inf
          %v957 = vsel %vm435, %v854, -inf
          %v958 = vsel %vm436, %v854, -inf
          %v959 = vsel %vm437, %v859, -inf
          %v960 = vsel %vm438, %v859, -inf
          %v961 = vsel %vm439, %v864, -inf
          %v962 = vsel %vm440, %v864, -inf
          %v963 = vsel %vm441, %v869, -inf
          %v964 = vsel %vm442, %v869, -inf
          %v965 = vsel %vm443, %v874, -inf
          %v966 = vsel %vm444, %v874, -inf
          %v967 = vsel %vm445, %v879, -inf
          %v968 = vsel %vm446, %v879, -inf
          %v969 = vsel %vm447, %v884, -inf
          %v970 = vsel %vm448, %v884, -inf
          %v971 = vsel %vm449, %v889, -inf
          %v972 = vsel %vm450, %v889, -inf
          %v973 = vsel %vm451, %v894, -inf
          %v974 = vsel %vm452, %v894, -inf
          %v975 = vsel %vm453, %v899, -inf
          %v976 = vsel %vm454, %v899, -inf
          %v977 = vsel %vm455, %v904, -inf
          %v978 = vsel %vm456, %v904, -inf
          %v979 = vsel %vm457, %v909, -inf
          %v980 = vsel %vm458, %v909, -inf
          %v981 = vsel %vm459, %v914, -inf
          %v982 = vsel %vm460, %v914, -inf
          %v983 = vsel %vm461, %v919, -inf
          %v984 = vsel %vm462, %v919, -inf
          %v985 = vmax.f32 %v921, %v925
          %v986 = vmax.f32 %v923, %v927
          %v987 = vmax.f32 %v985, %v929
          %v988 = vmax.f32 %v986, %v931
          %v989 = vmax.f32 %v987, %v933
          %v990 = vmax.f32 %v988, %v935
          %v991 = vmax.f32 %v989, %v937
          %v992 = vmax.f32 %v990, %v939
          %v993 = vmax.f32 %v991, %v941
          %v994 = vmax.f32 %v992, %v943
          %v995 = vmax.f32 %v993, %v945
          %v996 = vmax.f32 %v994, %v947
          %v997 = vmax.f32 %v995, %v949
          %v998 = vmax.f32 %v996, %v951
          %v999 = vmax.f32 %v997, %v953
          %v1000 = vmax.f32 %v998, %v955
          %v1001 = vmax.f32 %v999, %v957
          %v1002 = vmax.f32 %v1000, %v959
          %v1003 = vmax.f32 %v1001, %v961
          %v1004 = vmax.f32 %v1002, %v963
          %v1005 = vmax.f32 %v1003, %v965
          %v1006 = vmax.f32 %v1004, %v967
          %v1007 = vmax.f32 %v1005, %v969
          %v1008 = vmax.f32 %v1006, %v971
          %v1009 = vmax.f32 %v1007, %v973
          %v1010 = vmax.f32 %v1008, %v975
          %v1011 = vmax.f32 %v1009, %v977
          %v1012 = vmax.f32 %v1010, %v979
          %v1013 = vmax.f32 %v1011, %v981
          %v1014 = vmax.f32 %v1012, %v983
          %v1015 = vmax.f32 %v1013, %v1014
          %v1016 = vrot.slane %v1015, 4
          %v1017 = vmax.f32 %v1015, %v1016
          %v1018 = vrot.slane %v1017, 2
          %v1019 = vmax.f32 %v1017, %v1018
          %v1020 = vrot.slane %v1019, 1
          %v1021 = vmax.f32 %v1019, %v1020
          %v1022 = vmax.f32 %v922, %v926
          %v1023 = vmax.f32 %v924, %v928
          %v1024 = vmax.f32 %v1022, %v930
          %v1025 = vmax.f32 %v1023, %v932
          %v1026 = vmax.f32 %v1024, %v934
          %v1027 = vmax.f32 %v1025, %v936
          %v1028 = vmax.f32 %v1026, %v938
          %v1029 = vmax.f32 %v1027, %v940
          %v1030 = vmax.f32 %v1028, %v942
          %v1031 = vmax.f32 %v1029, %v944
          %v1032 = vmax.f32 %v1030, %v946
          %v1033 = vmax.f32 %v1031, %v948
          %v1034 = vmax.f32 %v1032, %v950
          %v1035 = vmax.f32 %v1033, %v952
          %v1036 = vmax.f32 %v1034, %v954
          %v1037 = vmax.f32 %v1035, %v956
          %v1038 = vmax.f32 %v1036, %v958
          %v1039 = vmax.f32 %v1037, %v960
          %v1040 = vmax.f32 %v1038, %v962
          %v1041 = vmax.f32 %v1039, %v964
          %v1042 = vmax.f32 %v1040, %v966
          %v1043 = vmax.f32 %v1041, %v968
          %v1044 = vmax.f32 %v1042, %v970
          %v1045 = vmax.f32 %v1043, %v972
          %v1046 = vmax.f32 %v1044, %v974
          %v1047 = vmax.f32 %v1045, %v976
          %v1048 = vmax.f32 %v1046, %v978
          %v1049 = vmax.f32 %v1047, %v980
          %v1050 = vmax.f32 %v1048, %v982
          %v1051 = vmax.f32 %v1049, %v984
          %v1052 = vmax.f32 %v1050, %v1051
          %v1053 = vrot.slane %v1052, 4
          %v1054 = vmax.f32 %v1052, %v1053
          %v1055 = vrot.slane %v1054, 2
          %v1056 = vmax.f32 %v1054, %v1055
          %v1057 = vrot.slane %v1056, 1
          %v1058 = vmax.f32 %v1056, %v1057
          %1059 = vset.pattern.permute.xlu0 1
          %1060 = vperm.xlu0 %1059, %v232
          %v1061 = vpop.permute.xlu0 %1060
          %1063 = vset.pattern.permute.xlu0 1
          %1064 = vperm.xlu0 %1063, %v233
          %v1065 = vpop.permute.xlu0 %1064
          %1067 = vset.pattern.permute.xlu0 1
          %1068 = vperm.xlu0 %1067, %v234
          %v1069 = vpop.permute.xlu0 %1068
          %1071 = vset.pattern.permute.xlu0 1
          %1072 = vperm.xlu0 %1071, %v235
          %v1073 = vpop.permute.xlu0 %1072
          %1075 = vset.pattern.permute.xlu0 1
          %1076 = vperm.xlu0 %1075, %v236
          %v1077 = vpop.permute.xlu0 %1076
          %1079 = vset.pattern.permute.xlu0 1
          %1080 = vperm.xlu0 %1079, %v237
          %v1081 = vpop.permute.xlu0 %1080
          %1083 = vset.pattern.permute.xlu0 1
          %1084 = vperm.xlu0 %1083, %v238
          %v1085 = vpop.permute.xlu0 %1084
          %1087 = vset.pattern.permute.xlu0 1
          %1088 = vperm.xlu0 %1087, %v239
          %v1089 = vpop.permute.xlu0 %1088
          %1091 = vset.pattern.permute.xlu0 1
          %1092 = vperm.xlu0 %1091, %v240
          %v1093 = vpop.permute.xlu0 %1092
          %1095 = vset.pattern.permute.xlu0 1
          %1096 = vperm.xlu0 %1095, %v241
          %v1097 = vpop.permute.xlu0 %1096
          %1099 = vset.pattern.permute.xlu0 1
          %1100 = vperm.xlu0 %1099, %v242
          %v1101 = vpop.permute.xlu0 %1100
          %1103 = vset.pattern.permute.xlu0 1
          %1104 = vperm.xlu0 %1103, %v243
          %v1105 = vpop.permute.xlu0 %1104
          %1107 = vset.pattern.permute.xlu0 1
          %1108 = vperm.xlu0 %1107, %v244
          %v1109 = vpop.permute.xlu0 %1108
          %1111 = vset.pattern.permute.xlu0 1
          %1112 = vperm.xlu0 %1111, %v245
          %v1113 = vpop.permute.xlu0 %1112
          %1115 = vset.pattern.permute.xlu0 1
          %1116 = vperm.xlu0 %1115, %v246
          %v1117 = vpop.permute.xlu0 %1116
          %1119 = vset.pattern.permute.xlu0 1
          %1120 = vperm.xlu0 %1119, %v247
          %v1121 = vpop.permute.xlu0 %1120
          %1123 = vset.pattern.permute.xlu0 1
          %1124 = vperm.xlu0 %1123, %v248
          %v1125 = vpop.permute.xlu0 %1124
          %1127 = vset.pattern.permute.xlu0 1
          %1128 = vperm.xlu0 %1127, %v249
          %v1129 = vpop.permute.xlu0 %1128
          %1131 = vset.pattern.permute.xlu0 1
          %1132 = vperm.xlu0 %1131, %v250
          %v1133 = vpop.permute.xlu0 %1132
          %1135 = vset.pattern.permute.xlu0 1
          %1136 = vperm.xlu0 %1135, %v251
          %v1137 = vpop.permute.xlu0 %1136
          %1139 = vset.pattern.permute.xlu0 1
          %1140 = vperm.xlu0 %1139, %v252
          %v1141 = vpop.permute.xlu0 %1140
          %1143 = vset.pattern.permute.xlu0 1
          %1144 = vperm.xlu0 %1143, %v253
          %v1145 = vpop.permute.xlu0 %1144
          %1147 = vset.pattern.permute.xlu0 1
          %1148 = vperm.xlu0 %1147, %v254
          %v1149 = vpop.permute.xlu0 %1148
          %1151 = vset.pattern.permute.xlu0 1
          %1152 = vperm.xlu0 %1151, %v255
          %v1153 = vpop.permute.xlu0 %1152
          %1155 = vset.pattern.permute.xlu0 1
          %1156 = vperm.xlu0 %1155, %v256
          %v1157 = vpop.permute.xlu0 %1156
          %1159 = vset.pattern.permute.xlu0 1
          %1160 = vperm.xlu0 %1159, %v257
          %v1161 = vpop.permute.xlu0 %1160
          %1163 = vset.pattern.permute.xlu0 1
          %1164 = vperm.xlu0 %1163, %v258
          %v1165 = vpop.permute.xlu0 %1164
          %1167 = vset.pattern.permute.xlu0 1
          %1168 = vperm.xlu0 %1167, %v259
          %v1169 = vpop.permute.xlu0 %1168
          %1171 = vset.pattern.permute.xlu0 1
          %1172 = vperm.xlu0 %1171, %v260
          %v1173 = vpop.permute.xlu0 %1172
          %1175 = vset.pattern.permute.xlu0 1
          %1176 = vperm.xlu0 %1175, %v261
          %v1177 = vpop.permute.xlu0 %1176
          %1179 = vset.pattern.permute.xlu0 1
          %1180 = vperm.xlu0 %1179, %v262
          %v1181 = vpop.permute.xlu0 %1180
          %1183 = vset.pattern.permute.xlu0 1
          %1184 = vperm.xlu0 %1183, %v263
          %v1185 = vpop.permute.xlu0 %1184
          %v1187 = vsel %vm399, %v1061, -inf
          %v1188 = vsel %vm400, %v1061, -inf
          %v1189 = vsel %vm401, %v1065, -inf
          %v1190 = vsel %vm402, %v1065, -inf
          %v1191 = vsel %vm403, %v1069, -inf
          %v1192 = vsel %vm404, %v1069, -inf
          %v1193 = vsel %vm405, %v1073, -inf
          %v1194 = vsel %vm406, %v1073, -inf
          %v1195 = vsel %vm407, %v1077, -inf
          %v1196 = vsel %vm408, %v1077, -inf
          %v1197 = vsel %vm409, %v1081, -inf
          %v1198 = vsel %vm410, %v1081, -inf
          %v1199 = vsel %vm411, %v1085, -inf
          %v1200 = vsel %vm412, %v1085, -inf
          %v1201 = vsel %vm413, %v1089, -inf
          %v1202 = vsel %vm414, %v1089, -inf
          %v1203 = vsel %vm415, %v1093, -inf
          %v1204 = vsel %vm416, %v1093, -inf
          %v1205 = vsel %vm417, %v1097, -inf
          %v1206 = vsel %vm418, %v1097, -inf
          %v1207 = vsel %vm419, %v1101, -inf
          %v1208 = vsel %vm420, %v1101, -inf
          %v1209 = vsel %vm421, %v1105, -inf
          %v1210 = vsel %vm422, %v1105, -inf
          %v1211 = vsel %vm423, %v1109, -inf
          %v1212 = vsel %vm424, %v1109, -inf
          %v1213 = vsel %vm425, %v1113, -inf
          %v1214 = vsel %vm426, %v1113, -inf
          %v1215 = vsel %vm427, %v1117, -inf
          %v1216 = vsel %vm428, %v1117, -inf
          %v1217 = vsel %vm429, %v1121, -inf
          %v1218 = vsel %vm430, %v1121, -inf
          %v1219 = vsel %vm431, %v1125, -inf
          %v1220 = vsel %vm432, %v1125, -inf
          %v1221 = vsel %vm433, %v1129, -inf
          %v1222 = vsel %vm434, %v1129, -inf
          %v1223 = vsel %vm435, %v1133, -inf
          %v1224 = vsel %vm436, %v1133, -inf
          %v1225 = vsel %vm437, %v1137, -inf
          %v1226 = vsel %vm438, %v1137, -inf
          %v1227 = vsel %vm439, %v1141, -inf
          %v1228 = vsel %vm440, %v1141, -inf
          %v1229 = vsel %vm441, %v1145, -inf
          %v1230 = vsel %vm442, %v1145, -inf
          %v1231 = vsel %vm443, %v1149, -inf
          %v1232 = vsel %vm444, %v1149, -inf
          %v1233 = vsel %vm445, %v1153, -inf
          %v1234 = vsel %vm446, %v1153, -inf
          %v1235 = vsel %vm447, %v1157, -inf
          %v1236 = vsel %vm448, %v1157, -inf
          %v1237 = vsel %vm449, %v1161, -inf
          %v1238 = vsel %vm450, %v1161, -inf
          %v1239 = vsel %vm451, %v1165, -inf
          %v1240 = vsel %vm452, %v1165, -inf
          %v1241 = vsel %vm453, %v1169, -inf
          %v1242 = vsel %vm454, %v1169, -inf
          %v1243 = vsel %vm455, %v1173, -inf
          %v1244 = vsel %vm456, %v1173, -inf
          %v1245 = vsel %vm457, %v1177, -inf
          %v1246 = vsel %vm458, %v1177, -inf
          %v1247 = vsel %vm459, %v1181, -inf
          %v1248 = vsel %vm460, %v1181, -inf
          %v1249 = vsel %vm461, %v1185, -inf
          %v1250 = vsel %vm462, %v1185, -inf
          %v1251 = vmax.f32 %v1187, %v1191
          %v1252 = vmax.f32 %v1189, %v1193
          %v1253 = vmax.f32 %v1251, %v1195
          %v1254 = vmax.f32 %v1252, %v1197
          %v1255 = vmax.f32 %v1253, %v1199
          %v1256 = vmax.f32 %v1254, %v1201
          %v1257 = vmax.f32 %v1255, %v1203
          %v1258 = vmax.f32 %v1256, %v1205
          %v1259 = vmax.f32 %v1257, %v1207
          %v1260 = vmax.f32 %v1258, %v1209
          %v1261 = vmax.f32 %v1259, %v1211
          %v1262 = vmax.f32 %v1260, %v1213
          %v1263 = vmax.f32 %v1261, %v1215
          %v1264 = vmax.f32 %v1262, %v1217
          %v1265 = vmax.f32 %v1263, %v1219
          %v1266 = vmax.f32 %v1264, %v1221
          %v1267 = vmax.f32 %v1265, %v1223
          %v1268 = vmax.f32 %v1266, %v1225
          %v1269 = vmax.f32 %v1267, %v1227
          %v1270 = vmax.f32 %v1268, %v1229
          %v1271 = vmax.f32 %v1269, %v1231
          %v1272 = vmax.f32 %v1270, %v1233
          %v1273 = vmax.f32 %v1271, %v1235
          %v1274 = vmax.f32 %v1272, %v1237
          %v1275 = vmax.f32 %v1273, %v1239
          %v1276 = vmax.f32 %v1274, %v1241
          %v1277 = vmax.f32 %v1275, %v1243
          %v1278 = vmax.f32 %v1276, %v1245
          %v1279 = vmax.f32 %v1277, %v1247
          %v1280 = vmax.f32 %v1278, %v1249
          %v1281 = vmax.f32 %v1279, %v1280
          %v1282 = vrot.slane %v1281, 4
          %v1283 = vmax.f32 %v1281, %v1282
          %v1284 = vrot.slane %v1283, 2
          %v1285 = vmax.f32 %v1283, %v1284
          %v1286 = vrot.slane %v1285, 1
          %v1287 = vmax.f32 %v1285, %v1286
          %v1288 = vmax.f32 %v1188, %v1192
          %v1289 = vmax.f32 %v1190, %v1194
          %v1290 = vmax.f32 %v1288, %v1196
          %v1291 = vmax.f32 %v1289, %v1198
          %v1292 = vmax.f32 %v1290, %v1200
          %v1293 = vmax.f32 %v1291, %v1202
          %v1294 = vmax.f32 %v1292, %v1204
          %v1295 = vmax.f32 %v1293, %v1206
          %v1296 = vmax.f32 %v1294, %v1208
          %v1297 = vmax.f32 %v1295, %v1210
          %v1298 = vmax.f32 %v1296, %v1212
          %v1299 = vmax.f32 %v1297, %v1214
          %v1300 = vmax.f32 %v1298, %v1216
          %v1301 = vmax.f32 %v1299, %v1218
          %v1302 = vmax.f32 %v1300, %v1220
          %v1303 = vmax.f32 %v1301, %v1222
          %v1304 = vmax.f32 %v1302, %v1224
          %v1305 = vmax.f32 %v1303, %v1226
          %v1306 = vmax.f32 %v1304, %v1228
          %v1307 = vmax.f32 %v1305, %v1230
          %v1308 = vmax.f32 %v1306, %v1232
          %v1309 = vmax.f32 %v1307, %v1234
          %v1310 = vmax.f32 %v1308, %v1236
          %v1311 = vmax.f32 %v1309, %v1238
          %v1312 = vmax.f32 %v1310, %v1240
          %v1313 = vmax.f32 %v1311, %v1242
          %v1314 = vmax.f32 %v1312, %v1244
          %v1315 = vmax.f32 %v1313, %v1246
          %v1316 = vmax.f32 %v1314, %v1248
          %v1317 = vmax.f32 %v1315, %v1250
          %v1318 = vmax.f32 %v1316, %v1317
          %v1319 = vrot.slane %v1318, 4
          %v1320 = vmax.f32 %v1318, %v1319
          %v1321 = vrot.slane %v1320, 2
          %v1322 = vmax.f32 %v1320, %v1321
          %v1323 = vrot.slane %v1322, 1
          %v1324 = vmax.f32 %v1322, %v1323
          %1325 = vset.pattern.permute.xlu0 1
          %1326 = vperm.xlu0 %1325, %v729
          %v1327 = vpop.permute.xlu0 %1326
          %1329 = vset.pattern.permute.xlu0 1
          %1330 = vperm.xlu0 %1329, %v730
          %v1331 = vpop.permute.xlu0 %1330
          %1333 = vset.pattern.permute.xlu0 1
          %1334 = vperm.xlu0 %1333, %v731
          %v1335 = vpop.permute.xlu0 %1334
          %1337 = vset.pattern.permute.xlu0 1
          %1338 = vperm.xlu0 %1337, %v732
          %v1339 = vpop.permute.xlu0 %1338
          %1341 = vset.pattern.permute.xlu0 1
          %1342 = vperm.xlu0 %1341, %v733
          %v1343 = vpop.permute.xlu0 %1342
          %1345 = vset.pattern.permute.xlu0 1
          %1346 = vperm.xlu0 %1345, %v734
          %v1347 = vpop.permute.xlu0 %1346
          %1349 = vset.pattern.permute.xlu0 1
          %1350 = vperm.xlu0 %1349, %v735
          %v1351 = vpop.permute.xlu0 %1350
          %1353 = vset.pattern.permute.xlu0 1
          %1354 = vperm.xlu0 %1353, %v736
          %v1355 = vpop.permute.xlu0 %1354
          %1357 = vset.pattern.permute.xlu0 1
          %1358 = vperm.xlu0 %1357, %v737
          %v1359 = vpop.permute.xlu0 %1358
          %1361 = vset.pattern.permute.xlu0 1
          %1362 = vperm.xlu0 %1361, %v738
          %v1363 = vpop.permute.xlu0 %1362
          %1365 = vset.pattern.permute.xlu0 1
          %1366 = vperm.xlu0 %1365, %v739
          %v1367 = vpop.permute.xlu0 %1366
          %1369 = vset.pattern.permute.xlu0 1
          %1370 = vperm.xlu0 %1369, %v740
          %v1371 = vpop.permute.xlu0 %1370
          %1373 = vset.pattern.permute.xlu0 1
          %1374 = vperm.xlu0 %1373, %v741
          %v1375 = vpop.permute.xlu0 %1374
          %1377 = vset.pattern.permute.xlu0 1
          %1378 = vperm.xlu0 %1377, %v742
          %v1379 = vpop.permute.xlu0 %1378
          %1381 = vset.pattern.permute.xlu0 1
          %1382 = vperm.xlu0 %1381, %v743
          %v1383 = vpop.permute.xlu0 %1382
          %1385 = vset.pattern.permute.xlu0 1
          %1386 = vperm.xlu0 %1385, %v744
          %v1387 = vpop.permute.xlu0 %1386
          %1389 = vset.pattern.permute.xlu0 1
          %1390 = vperm.xlu0 %1389, %v745
          %v1391 = vpop.permute.xlu0 %1390
          %1393 = vset.pattern.permute.xlu0 1
          %1394 = vperm.xlu0 %1393, %v746
          %v1395 = vpop.permute.xlu0 %1394
          %1397 = vset.pattern.permute.xlu0 1
          %1398 = vperm.xlu0 %1397, %v747
          %v1399 = vpop.permute.xlu0 %1398
          %1401 = vset.pattern.permute.xlu0 1
          %1402 = vperm.xlu0 %1401, %v748
          %v1403 = vpop.permute.xlu0 %1402
          %1405 = vset.pattern.permute.xlu0 1
          %1406 = vperm.xlu0 %1405, %v749
          %v1407 = vpop.permute.xlu0 %1406
          %1409 = vset.pattern.permute.xlu0 1
          %1410 = vperm.xlu0 %1409, %v750
          %v1411 = vpop.permute.xlu0 %1410
          %1413 = vset.pattern.permute.xlu0 1
          %1414 = vperm.xlu0 %1413, %v751
          %v1415 = vpop.permute.xlu0 %1414
          %1417 = vset.pattern.permute.xlu0 1
          %1418 = vperm.xlu0 %1417, %v752
          %v1419 = vpop.permute.xlu0 %1418
          %1421 = vset.pattern.permute.xlu0 1
          %1422 = vperm.xlu0 %1421, %v753
          %v1423 = vpop.permute.xlu0 %1422
          %1425 = vset.pattern.permute.xlu0 1
          %1426 = vperm.xlu0 %1425, %v754
          %v1427 = vpop.permute.xlu0 %1426
          %1429 = vset.pattern.permute.xlu0 1
          %1430 = vperm.xlu0 %1429, %v755
          %v1431 = vpop.permute.xlu0 %1430
          %1433 = vset.pattern.permute.xlu0 1
          %1434 = vperm.xlu0 %1433, %v756
          %v1435 = vpop.permute.xlu0 %1434
          %1437 = vset.pattern.permute.xlu0 1
          %1438 = vperm.xlu0 %1437, %v757
          %v1439 = vpop.permute.xlu0 %1438
          %1441 = vset.pattern.permute.xlu0 1
          %1442 = vperm.xlu0 %1441, %v758
          %v1443 = vpop.permute.xlu0 %1442
          %1445 = vset.pattern.permute.xlu0 1
          %1446 = vperm.xlu0 %1445, %v759
          %v1447 = vpop.permute.xlu0 %1446
          %1449 = vset.pattern.permute.xlu0 1
          %1450 = vperm.xlu0 %1449, %v760
          %v1451 = vpop.permute.xlu0 %1450
          %v1453 = vsel %vm399, %v1327, -inf
          %v1454 = vsel %vm400, %v1327, -inf
          %v1455 = vsel %vm401, %v1331, -inf
          %v1456 = vsel %vm402, %v1331, -inf
          %v1457 = vsel %vm403, %v1335, -inf
          %v1458 = vsel %vm404, %v1335, -inf
          %v1459 = vsel %vm405, %v1339, -inf
          %v1460 = vsel %vm406, %v1339, -inf
          %v1461 = vsel %vm407, %v1343, -inf
          %v1462 = vsel %vm408, %v1343, -inf
          %v1463 = vsel %vm409, %v1347, -inf
          %v1464 = vsel %vm410, %v1347, -inf
          %v1465 = vsel %vm411, %v1351, -inf
          %v1466 = vsel %vm412, %v1351, -inf
          %v1467 = vsel %vm413, %v1355, -inf
          %v1468 = vsel %vm414, %v1355, -inf
          %v1469 = vsel %vm415, %v1359, -inf
          %v1470 = vsel %vm416, %v1359, -inf
          %v1471 = vsel %vm417, %v1363, -inf
          %v1472 = vsel %vm418, %v1363, -inf
          %v1473 = vsel %vm419, %v1367, -inf
          %v1474 = vsel %vm420, %v1367, -inf
          %v1475 = vsel %vm421, %v1371, -inf
          %v1476 = vsel %vm422, %v1371, -inf
          %v1477 = vsel %vm423, %v1375, -inf
          %v1478 = vsel %vm424, %v1375, -inf
          %v1479 = vsel %vm425, %v1379, -inf
          %v1480 = vsel %vm426, %v1379, -inf
          %v1481 = vsel %vm427, %v1383, -inf
          %v1482 = vsel %vm428, %v1383, -inf
          %v1483 = vsel %vm429, %v1387, -inf
          %v1484 = vsel %vm430, %v1387, -inf
          %v1485 = vsel %vm431, %v1391, -inf
          %v1486 = vsel %vm432, %v1391, -inf
          %v1487 = vsel %vm433, %v1395, -inf
          %v1488 = vsel %vm434, %v1395, -inf
          %v1489 = vsel %vm435, %v1399, -inf
          %v1490 = vsel %vm436, %v1399, -inf
          %v1491 = vsel %vm437, %v1403, -inf
          %v1492 = vsel %vm438, %v1403, -inf
          %v1493 = vsel %vm439, %v1407, -inf
          %v1494 = vsel %vm440, %v1407, -inf
          %v1495 = vsel %vm441, %v1411, -inf
          %v1496 = vsel %vm442, %v1411, -inf
          %v1497 = vsel %vm443, %v1415, -inf
          %v1498 = vsel %vm444, %v1415, -inf
          %v1499 = vsel %vm445, %v1419, -inf
          %v1500 = vsel %vm446, %v1419, -inf
          %v1501 = vsel %vm447, %v1423, -inf
          %v1502 = vsel %vm448, %v1423, -inf
          %v1503 = vsel %vm449, %v1427, -inf
          %v1504 = vsel %vm450, %v1427, -inf
          %v1505 = vsel %vm451, %v1431, -inf
          %v1506 = vsel %vm452, %v1431, -inf
          %v1507 = vsel %vm453, %v1435, -inf
          %v1508 = vsel %vm454, %v1435, -inf
          %v1509 = vsel %vm455, %v1439, -inf
          %v1510 = vsel %vm456, %v1439, -inf
          %v1511 = vsel %vm457, %v1443, -inf
          %v1512 = vsel %vm458, %v1443, -inf
          %v1513 = vsel %vm459, %v1447, -inf
          %v1514 = vsel %vm460, %v1447, -inf
          %v1515 = vsel %vm461, %v1451, -inf
          %v1516 = vsel %vm462, %v1451, -inf
          %v1517 = vmax.f32 %v1453, %v1457
          %v1518 = vmax.f32 %v1455, %v1459
          %v1519 = vmax.f32 %v1517, %v1461
          %v1520 = vmax.f32 %v1518, %v1463
          %v1521 = vmax.f32 %v1519, %v1465
          %v1522 = vmax.f32 %v1520, %v1467
          %v1523 = vmax.f32 %v1521, %v1469
          %v1524 = vmax.f32 %v1522, %v1471
          %v1525 = vmax.f32 %v1523, %v1473
          %v1526 = vmax.f32 %v1524, %v1475
          %v1527 = vmax.f32 %v1525, %v1477
          %v1528 = vmax.f32 %v1526, %v1479
          %v1529 = vmax.f32 %v1527, %v1481
          %v1530 = vmax.f32 %v1528, %v1483
          %v1531 = vmax.f32 %v1529, %v1485
          %v1532 = vmax.f32 %v1530, %v1487
          %v1533 = vmax.f32 %v1531, %v1489
          %v1534 = vmax.f32 %v1532, %v1491
          %v1535 = vmax.f32 %v1533, %v1493
          %v1536 = vmax.f32 %v1534, %v1495
          %v1537 = vmax.f32 %v1535, %v1497
          %v1538 = vmax.f32 %v1536, %v1499
          %v1539 = vmax.f32 %v1537, %v1501
          %v1540 = vmax.f32 %v1538, %v1503
          %v1541 = vmax.f32 %v1539, %v1505
          %v1542 = vmax.f32 %v1540, %v1507
          %v1543 = vmax.f32 %v1541, %v1509
          %v1544 = vmax.f32 %v1542, %v1511
          %v1545 = vmax.f32 %v1543, %v1513
          %v1546 = vmax.f32 %v1544, %v1515
          %v1547 = vmax.f32 %v1545, %v1546
          %v1548 = vrot.slane %v1547, 4
          %v1549 = vmax.f32 %v1547, %v1548
          %v1550 = vrot.slane %v1549, 2
          %v1551 = vmax.f32 %v1549, %v1550
          %v1552 = vrot.slane %v1551, 1
          %v1553 = vmax.f32 %v1551, %v1552
          %v1554 = vmax.f32 %v1454, %v1458
          %v1555 = vmax.f32 %v1456, %v1460
          %v1556 = vmax.f32 %v1554, %v1462
          %v1557 = vmax.f32 %v1555, %v1464
          %v1558 = vmax.f32 %v1556, %v1466
          %v1559 = vmax.f32 %v1557, %v1468
          %v1560 = vmax.f32 %v1558, %v1470
          %v1561 = vmax.f32 %v1559, %v1472
          %v1562 = vmax.f32 %v1560, %v1474
          %v1563 = vmax.f32 %v1561, %v1476
          %v1564 = vmax.f32 %v1562, %v1478
          %v1565 = vmax.f32 %v1563, %v1480
          %v1566 = vmax.f32 %v1564, %v1482
          %v1567 = vmax.f32 %v1565, %v1484
          %v1568 = vmax.f32 %v1566, %v1486
          %v1569 = vmax.f32 %v1567, %v1488
          %v1570 = vmax.f32 %v1568, %v1490
          %v1571 = vmax.f32 %v1569, %v1492
          %v1572 = vmax.f32 %v1570, %v1494
          %v1573 = vmax.f32 %v1571, %v1496
          %v1574 = vmax.f32 %v1572, %v1498
          %v1575 = vmax.f32 %v1573, %v1500
          %v1576 = vmax.f32 %v1574, %v1502
          %v1577 = vmax.f32 %v1575, %v1504
          %v1578 = vmax.f32 %v1576, %v1506
          %v1579 = vmax.f32 %v1577, %v1508
          %v1580 = vmax.f32 %v1578, %v1510
          %v1581 = vmax.f32 %v1579, %v1512
          %v1582 = vmax.f32 %v1580, %v1514
          %v1583 = vmax.f32 %v1581, %v1516
          %v1584 = vmax.f32 %v1582, %v1583
          %v1585 = vrot.slane %v1584, 4
          %v1586 = vmax.f32 %v1584, %v1585
          %v1587 = vrot.slane %v1586, 2
          %v1588 = vmax.f32 %v1586, %v1587
          %v1589 = vrot.slane %v1588, 1
          %v1590 = vmax.f32 %v1588, %v1589
          %vm1591 = vcmask 1040384
          %v1592 = vsel %vm1591, %v691, %v1021
          %v1593 = vsel %vm1591, %v728, %v1058
          %vm1594 = vcmask 1041408
          %v1595 = vsel %vm1594, %v1592, %v1287
          %v1596 = vsel %vm1594, %v1593, %v1324
          %vm1597 = vcmask 1042432
          %v1598 = vsel %vm1597, %v1595, %v1553
          %v1599 = vsel %vm1597, %v1596, %v1590
          %v1600 = vld [vmem:[#allocation2] sm:$0xff]
          %v1603 = vrot.slane %v1599, 4
          %vm1604 = vcmask 1043456
          %v1605 = vsel %vm1604, %v1598, %v1603
          %v1607 = vmax.f32 %v1600, %v1605
          %1608 = vst [vmem:[#allocation2] sm:$0xff] %v1607
        $region36: #{tpu_custom_call.1} parent=27 // pred_fallthru
          _
        %p1609 = scmp.eq.s32.totalorder %s36, 4
        // Predicated region
        $region37: #{tpu_custom_call.1} parent=27 // pred_check
          %p1610 = pneg %p1609
        $region38: #{tpu_custom_call.1} parent=27 // pred_check_branch
          %1612 = sbr.rel (%p1610) target = $region40
        $region39: #{tpu_custom_call.1} parent=27 // pred_region
          %v1613 = vld [vmem:[#allocation2] sm:$0xff]
          %vm1614 = vcmp.gt.f32.partialorder %v1613, -inf
          %v1616 = vrot.slane %v1613, 5
          %v1617 = vrot.slane %v1616, 4
          %v1619 = vadd.f32 %v1613, %v1617
          %v1620 = vsel %vm1614, %v1619, 0.0
          %v1622 = vrot.slane %v1619, 6
          %v1623 = vrot.slane %v1622, 4
          %v1625 = vsel %vm1614, %v1623, 0.0
          %v1626 = vld [vmem:[%s219] ss:$8 sm:$0x3]
          %s1627 = scalar_lea.vmem %s219, 1
          %v1628 = vld [vmem:[%s1627] ss:$8 sm:$0x3]
          %s1629 = scalar_lea.vmem %s219, 2
          %v1630 = vld [vmem:[%s1629] ss:$8 sm:$0x3]
          %v1631 = vmul.f32 %v1628, %v1630
          %v1633 = vrot.slane %v1620, 3
          %vm1634 = vcmask 1040384
          %v1635 = vsel %vm1634, %v1620, %v1633
          %v1637 = vmul.f32 %v1631, %v1635
          %v1638 = vmul.f32 %v1626, %v1630
          %v1640 = vrot.slane %v1625, 3
          %v1641 = vsel %vm1634, %v1625, %v1640
          %v1643 = vmul.f32 %v1638, %v1641
          %v1644 = vmul.f32 %v1643, 1.2
          %v1645 = vadd.f32 %v1637, %v1644
          %v1646 = vlaneseq
          %vm1647 = vcmp.ge.s32.totalorder %v1646, 0
          %vm1648 = vcmp.lt.s32.totalorder %v1646, 256
          %vm1649 = vmand %vm1647, %vm1648
          %1650 = vst.msk [vmem:[%s200] sm:$0x3] %vm1649, %v1645
        $region40: #{tpu_custom_call.1} parent=27 // pred_fallthru
          _
        %s1651 = sand.u32 %s111, 1
        %s1652 = scalar_lea.sflag [#allocation7], %s1651
        %s1653 = sand.u32 %s111, 1
        %s1654 = smul.addr %s1653, 2
        %s1655 = scalar_lea.vmem [#allocation6], %s1654
        // Predicated region
        $region41: #{tpu_custom_call.1} parent=27 // pred_check
          %p1656 = pneg %p121
        $region42: #{tpu_custom_call.1} parent=27 // pred_check_branch
          %1658 = sbr.rel (%p1656) target = $region44
        $region43: #{tpu_custom_call.1} parent=27 // pred_region
          %s1659 = smul.u32 2, %s35
          %1661 = vsyncadd %s1652, 0
          %s1662 = scalar_lea.hbm %s4, %s1659
          %s1664 = sshll.u32 %s1655, 4
          %s1665 = int_to_ptr.vmem [resolvable:$true] %s1664
          %s1666 = sshll.u32 %s1662, 4
          %s1667 = int_to_ptr.hbm [resolvable:$true] %s1666
          %1669 = dma.vmem_to_hbm [thread:$0]  %s1665, 32, %s1667, %s1652
        $region44: #{tpu_custom_call.1} parent=27 // pred_fallthru
          _
      $region28: #{tpu_custom_call.1} parent=5 // pred_fallthru
        _
      %p1670 = scmp.le.s32.totalorder 2, %s26
      // Predicated region
      $region45: #{tpu_custom_call.1} parent=5 // pred_check
        %p1671 = pneg %p1670
      $region46: #{tpu_custom_call.1} parent=5 // pred_check_branch
        %1673 = sbr.rel (%p1671) target = $region48
      $region47: #{tpu_custom_call.1} parent=5 // pred_region
        %s1674 = ssub.s32 %s26, 2
        // Predicated region
        $region49: #{tpu_custom_call.1} parent=47 // pred_check
          %p1675 = pneg %p127
        $region50: #{tpu_custom_call.1} parent=47 // pred_check_branch
          %1677 = sbr.rel (%p1675) target = $region52
        $region51: #{tpu_custom_call.1} parent=47 // pred_region
          %s1678 = sand.u32 %s112, 1
          %s1679 = scalar_lea.sflag [#allocation7], %s1678
          %s1680 = sand.u32 %s112, 1
          %s1681 = smul.addr %s1680, 2
          %s1682 = scalar_lea.vmem [#allocation6], %s1681
          %1684 = dma.done %s1679, 32
        $region52: #{tpu_custom_call.1} parent=47 // pred_fallthru
          _
      $region48: #{tpu_custom_call.1} parent=5 // pred_fallthru
        _
    $region6: #{tpu_custom_call.1} parent=1 // loop_footer
      %s30 = sadd.s32 1, %s26
    $region7: #{tpu_custom_call.1} parent=1 // loop_footer_branch
      %25 = sbr.rel target = $region3
    $region8: #{tpu_custom_call.1} parent=1 // loop_exit
      _
    %1685 = vsyncpa [#allocation7], 1
    %s1686 = scalar_lea.sflag [#allocation7], 1
    %1687 = vsyncpa %s1686, 1

</llo_original>
